<compile_context>
chip_gen: v5e
topology: v5e:2x2
jax: 0.10.0
libtpu: 0.0.40
codegen_flags: <defaults>
</compile_context>

<pallas_src>
import functools

import jax
import jax.numpy as jnp
from jax import lax
from jax.experimental import pallas as pl
from jax.experimental.pallas import tpu as pltpu


def textrcnn_kernel(tokf_ref, tokb_ref, table_ref, whh_ref, fcw_ref, fcb_ref,
                    out_ref, *, S, B, BP, V, E, H, EPAD):
    """Fused one-hot embedding/input-projection + bi-LSTM + relu/max-pool + fc.

    tokf_ref  : (S*BP, 1) int32   fwd token ids (row = t*BP + b), -1 on pad rows
    tokb_ref  : (S*BP, 1) int32   V + bwd token ids (time-reversed), -1 on pad rows
    table_ref : (2V, EPAD+8H) f32 rows 0:V   = [emb | fwd-stripe (emb@W_in+b)]
                                  rows V:2V  = [ 0  | bwd-stripe (emb@W_in+b)]
                                  gate cols are [i_f,i_b,f_f,f_b,g_f,g_b,o_f,o_b]
    whh_ref   : (2H, 8H) f32      block-diagonal recurrent weight, same col layout
    fcw_ref   : (E+2H, C), fcb_ref: (1, C)
    out_ref   : (B, C)
    """
    R = S * BP

    # 1) One-hot gather + input projections (both directions, biases folded in)
    #    as a single (R, 2V) x (2V, EPAD+8H) MXU call.
    iota = lax.broadcasted_iota(jnp.int32, (R, 2 * V), 1)
    onehot = ((iota == tokf_ref[...]) | (iota == tokb_ref[...])).astype(jnp.float32)
    big = jnp.dot(onehot, table_ref[...], preferred_element_type=jnp.float32)

    embed = big[:, 0:E]                       # (R, E)   fwd time order
    zall = big[:, EPAD:EPAD + 8 * H]          # (R, 8H)  row block s = fwd@s + bwd@(S-1-s)

    # 2) Embedding max-pool (relu folded via the zero init), off the recurrence.
    pooled_e = jnp.zeros((BP, E), jnp.float32)
    for t in range(S):
        pooled_e = jnp.maximum(pooled_e, embed[t * BP:(t + 1) * BP, :])

    # 3) Fused fwd/bwd recurrence: one (BP,2H)x(2H,8H) matmul per step.
    whh = whh_ref[...]
    h_cat = jnp.zeros((BP, 2 * H), jnp.float32)       # [h_f | h_b]
    c_cat = jnp.zeros((BP, 2 * H), jnp.float32)
    pooled_h = jnp.zeros((BP, 2 * H), jnp.float32)    # zero init == relu

    for s in range(S):
        z = (zall[s * BP:(s + 1) * BP, :]
             + jnp.dot(h_cat, whh, preferred_element_type=jnp.float32))
        sif = jax.nn.sigmoid(z[:, 0:4 * H])           # i,f gates, both directions
        i_cat = sif[:, 0:2 * H]
        f_cat = sif[:, 2 * H:4 * H]
        g_cat = jnp.tanh(z[:, 4 * H:6 * H])
        o_cat = jax.nn.sigmoid(z[:, 6 * H:8 * H])
        c_cat = f_cat * c_cat + i_cat * g_cat
        h_cat = o_cat * jnp.tanh(c_cat)
        pooled_h = jnp.maximum(pooled_h, h_cat)

    # 4) Linear head over [pooled_embed | pooled_hf | pooled_hb] (two dots).
    logits = (jnp.dot(pooled_e, fcw_ref[0:E, :], preferred_element_type=jnp.float32)
              + jnp.dot(pooled_h, fcw_ref[E:E + 2 * H, :],
                        preferred_element_type=jnp.float32)
              + fcb_ref[...])
    out_ref[...] = logits[0:B, :]                     # drop the pad rows


def prepare_tokens(tokens, V, BP):
    """tokens (B,S) -> two (S*BP,1) int32 columns (fwd ids, V+reversed ids)."""
    B, S = tokens.shape
    tok_f = jnp.full((S, BP), -1, jnp.int32)
    tok_f = tok_f.at[:, 0:B].set(tokens.T)                    # row s, col b = tok[b, s]
    tok_b = jnp.full((S, BP), -1, jnp.int32)
    tok_b = tok_b.at[:, 0:B].set(tokens[:, ::-1].T + V)       # row s -> tok[b, S-1-s] + V
    return tok_f.reshape(S * BP, 1), tok_b.reshape(S * BP, 1)


def textrcnn_forward(tokens, params):
    """tokens: (B, S) int32.  Returns (B, num_classes) f32."""
    B, S = tokens.shape
    V, E = params["embedding"].shape
    H = params["whh_f"].shape[0]
    C = params["fc_w"].shape[1]
    BP = 8                                   # batch rows padded to a full sublane
    assert B <= BP

    tok_f, tok_b = prepare_tokens(tokens, V, BP)
    kernel = functools.partial(textrcnn_kernel, S=S, B=B, BP=BP, V=V, E=E, H=H,
                               EPAD=int(params["epad"]))
    vmem = pl.BlockSpec(memory_space=pltpu.MemorySpace.VMEM)
    return pl.pallas_call(
        kernel,
        out_shape=jax.ShapeDtypeStruct((B, C), jnp.float32),
        in_specs=[vmem] * 6,
        out_specs=vmem,
    )(tok_f, tok_b, params["table"], params["whh_blk"],
      params["fc_w"], params["fc_b"])


def _stripe_cat(w_f, w_b, H):
    """[i,f,g,o] x {fwd,bwd} columns -> gate-major / direction-minor (…, 8H)."""
    parts = []
    for gi in range(4):
        parts.append(w_f[..., gi * H:(gi + 1) * H])
        parts.append(w_b[..., gi * H:(gi + 1) * H])
    return jnp.concatenate(parts, axis=-1)


def prepare_kernel_params(p, V, E, H):
    """Host-side one-time layouts: one-hot table, block-diag recurrent weight."""
    emb = p["embedding"]
    w_in = _stripe_cat(p["wih_f"], p["wih_b"], H)             # (E, 8H)
    b_in = _stripe_cat(p["b_f"], p["b_b"], H)                 # (1, 8H)

    zf = jnp.zeros((H, H), jnp.float32)
    cols = []
    for gi in range(4):
        cols.append(jnp.concatenate([p["whh_f"][:, gi * H:(gi + 1) * H], zf], axis=0))
        cols.append(jnp.concatenate([zf, p["whh_b"][:, gi * H:(gi + 1) * H]], axis=0))
    whh_blk = jnp.concatenate(cols, axis=1)                   # (2H, 8H) block-diag

    stripe = jnp.arange(8 * H) // H
    fwd_mask = ((stripe % 2) == 0).astype(jnp.float32)[None, :]
    bwd_mask = 1.0 - fwd_mask

    proj = emb @ w_in + b_in                                  # (V, 8H), biases folded
    epad = ((E + 127) // 128) * 128                           # lane-align the zin block
    table = jnp.zeros((2 * V, epad + 8 * H), jnp.float32)
    table = table.at[0:V, 0:E].set(emb)
    table = table.at[0:V, epad:].set(proj * fwd_mask)
    table = table.at[V:, epad:].set(proj * bwd_mask)

    return {"table": table, "whh_blk": whh_blk, "epad": epad}


def init_params(key, V, E, H, C):
    ks = jax.random.split(key, 10)
    scale = 0.1
    emb = jax.random.normal(ks[0], (V, E), jnp.float32) * scale
    emb = emb.at[V - 1].set(0.0)  # padding_idx row initialized to zero
    p = {
        "embedding": emb,
        # LSTM weights stored transposed vs PyTorch: (E,4H)/(H,4H); gate order i,f,g,o.
        "wih_f": jax.random.normal(ks[1], (E, 4 * H), jnp.float32) * scale,
        "whh_f": jax.random.normal(ks[2], (H, 4 * H), jnp.float32) * scale,
        "b_f": jax.random.normal(ks[3], (1, 4 * H), jnp.float32) * scale,  # b_ih + b_hh
        "wih_b": jax.random.normal(ks[4], (E, 4 * H), jnp.float32) * scale,
        "whh_b": jax.random.normal(ks[5], (H, 4 * H), jnp.float32) * scale,
        "b_b": jax.random.normal(ks[6], (1, 4 * H), jnp.float32) * scale,
        # fc stored transposed vs PyTorch Linear: (E+2H, C), bias (1, C).
        "fc_w": jax.random.normal(ks[7], (E + 2 * H, C), jnp.float32) * scale,
        "fc_b": jax.random.normal(ks[8], (1, C), jnp.float32) * scale,
    }
    p.update(prepare_kernel_params(p, V, E, H))
    return p


def reference_forward(tokens, params):
    """Pure-JAX reference mirroring the PyTorch forward (eval mode)."""
    embed = jnp.take(params["embedding"], tokens, axis=0)   # (B, S, E)
    B, S, E = embed.shape
    H = params["whh_f"].shape[0]

    def cell(carry, x_t, wih, whh, b):
        h, c = carry
        z = x_t @ wih + h @ whh + b
        i = jax.nn.sigmoid(z[:, :H])
        f = jax.nn.sigmoid(z[:, H:2 * H])
        g = jnp.tanh(z[:, 2 * H:3 * H])
        o = jax.nn.sigmoid(z[:, 3 * H:])
        c = f * c + i * g
        h = o * jnp.tanh(c)
        return (h, c), h

    h0 = jnp.zeros((B, H), jnp.float32)
    c0 = jnp.zeros((B, H), jnp.float32)
    xs = jnp.transpose(embed, (1, 0, 2))                    # (S, B, E)
    _, hf = lax.scan(
        lambda carry, x: cell(carry, x, params["wih_f"], params["whh_f"],
                              params["b_f"]), (h0, c0), xs)
    _, hb = lax.scan(
        lambda carry, x: cell(carry, x, params["wih_b"], params["whh_b"],
                              params["b_b"]), (h0, c0), xs[::-1])
    hb = hb[::-1]
    out = jnp.concatenate([xs, hf, hb], axis=-1)            # (S, B, E+2H)
    out = jnp.maximum(out, 0.0)
    pooled = jnp.max(out, axis=0)                           # (B, E+2H)
    return pooled @ params["fc_w"] + params["fc_b"]


if __name__ == "__main__":
    V, E, H, S, B, C = 64, 32, 32, 8, 2, 4   # vocab, embed, hidden, pad_size, batch, classes

    key = jax.random.PRNGKey(0)
    k_params, k_tok = jax.random.split(key)
    params = init_params(k_params, V, E, H, C)

    tokens = jax.random.randint(k_tok, (B, S), 0, V, dtype=jnp.int32)
    seq_len = jnp.full((B,), S, jnp.int32)   # mirrors the (x, seq_len) tuple input; ignored like PyTorch

    out = textrcnn_forward(tokens, params)
    out = jax.block_until_ready(out)

    ref = reference_forward(tokens, params)
    assert out.shape == (B, C)
    assert jnp.allclose(out, ref, atol=1e-4, rtol=1e-4), (out, ref)
    print("KERNEL_OK")
</pallas_src>

<mosaic_0001>
module attributes {stable_mosaic.version = 11 : i64} {
  func.func @textrcnn_kernel(%arg0: memref<64x1xi32, #tpu.memory_space<vmem>>, %arg1: memref<64x1xi32, #tpu.memory_space<vmem>>, %arg2: memref<128x384xf32, #tpu.memory_space<vmem>>, %arg3: memref<64x256xf32, #tpu.memory_space<vmem>>, %arg4: memref<96x4xf32, #tpu.memory_space<vmem>>, %arg5: memref<1x4xf32, #tpu.memory_space<vmem>>, %arg6: memref<2x4xf32, #tpu.memory_space<vmem>>) attributes {dimension_semantics = [], scalar_prefetch = 0 : i64, scratch_operands = 0 : i64, tpu.core_type = #tpu.core_type<tc>} {
    %0 = tpu.iota {dimensions = array<i32: 1>} : vector<64x128xi32>
    %c0 = arith.constant 0 : index
    %c0_0 = arith.constant 0 : index
    %1 = vector.load %arg0[%c0, %c0_0] : memref<64x1xi32, #tpu.memory_space<vmem>>, vector<64x1xi32>
    %2 = vector.broadcast %1 : vector<64x1xi32> to vector<64x128xi32>
    %3 = arith.cmpi eq, %0, %2 : vector<64x128xi32>
    %c0_1 = arith.constant 0 : index
    %c0_2 = arith.constant 0 : index
    %4 = vector.load %arg1[%c0_1, %c0_2] : memref<64x1xi32, #tpu.memory_space<vmem>>, vector<64x1xi32>
    %5 = vector.broadcast %4 : vector<64x1xi32> to vector<64x128xi32>
    %6 = arith.cmpi eq, %0, %5 : vector<64x128xi32>
    %7 = arith.ori %3, %6 : vector<64x128xi1>
    %8 = arith.extui %7 : vector<64x128xi1> to vector<64x128xi32>
    %9 = arith.sitofp %8 : vector<64x128xi32> to vector<64x128xf32>
    %c0_3 = arith.constant 0 : index
    %c0_4 = arith.constant 0 : index
    %10 = vector.load %arg2[%c0_3, %c0_4] : memref<128x384xf32, #tpu.memory_space<vmem>>, vector<128x384xf32>
    %cst = arith.constant dense<0.000000e+00> : vector<64x384xf32>
    %11 = tpu.matmul %9, %10, %cst {dimension_numbers = #tpu.dot_dimension_numbers<[1], [0], [0], [1], [0, 0, 1, 1], [], []>} : vector<64x128xf32>, vector<128x384xf32>, vector<64x384xf32> -> vector<64x384xf32>
    %12 = vector.extract_strided_slice %11 {offsets = [0, 0], sizes = [64, 32], strides = [1, 1]} : vector<64x384xf32> to vector<64x32xf32>
    %13 = vector.extract_strided_slice %11 {offsets = [0, 128], sizes = [64, 256], strides = [1, 1]} : vector<64x384xf32> to vector<64x256xf32>
    %cst_5 = arith.constant 0.000000e+00 : f32
    %14 = vector.broadcast %cst_5 : f32 to vector<8x32xf32>
    %15 = vector.extract_strided_slice %12 {offsets = [0, 0], sizes = [8, 32], strides = [1, 1]} : vector<64x32xf32> to vector<8x32xf32>
    %16 = arith.maximumf %14, %15 : vector<8x32xf32>
    %17 = vector.extract_strided_slice %12 {offsets = [8, 0], sizes = [8, 32], strides = [1, 1]} : vector<64x32xf32> to vector<8x32xf32>
    %18 = arith.maximumf %16, %17 : vector<8x32xf32>
    %19 = vector.extract_strided_slice %12 {offsets = [16, 0], sizes = [8, 32], strides = [1, 1]} : vector<64x32xf32> to vector<8x32xf32>
    %20 = arith.maximumf %18, %19 : vector<8x32xf32>
    %21 = vector.extract_strided_slice %12 {offsets = [24, 0], sizes = [8, 32], strides = [1, 1]} : vector<64x32xf32> to vector<8x32xf32>
    %22 = arith.maximumf %20, %21 : vector<8x32xf32>
    %23 = vector.extract_strided_slice %12 {offsets = [32, 0], sizes = [8, 32], strides = [1, 1]} : vector<64x32xf32> to vector<8x32xf32>
    %24 = arith.maximumf %22, %23 : vector<8x32xf32>
    %25 = vector.extract_strided_slice %12 {offsets = [40, 0], sizes = [8, 32], strides = [1, 1]} : vector<64x32xf32> to vector<8x32xf32>
    %26 = arith.maximumf %24, %25 : vector<8x32xf32>
    %27 = vector.extract_strided_slice %12 {offsets = [48, 0], sizes = [8, 32], strides = [1, 1]} : vector<64x32xf32> to vector<8x32xf32>
    %28 = arith.maximumf %26, %27 : vector<8x32xf32>
    %29 = vector.extract_strided_slice %12 {offsets = [56, 0], sizes = [8, 32], strides = [1, 1]} : vector<64x32xf32> to vector<8x32xf32>
    %30 = arith.maximumf %28, %29 : vector<8x32xf32>
    %c0_6 = arith.constant 0 : index
    %c0_7 = arith.constant 0 : index
    %31 = vector.load %arg3[%c0_6, %c0_7] : memref<64x256xf32, #tpu.memory_space<vmem>>, vector<64x256xf32>
    %cst_8 = arith.constant 0.000000e+00 : f32
    %32 = vector.broadcast %cst_8 : f32 to vector<8x64xf32>
    %cst_9 = arith.constant 0.000000e+00 : f32
    %33 = vector.broadcast %cst_9 : f32 to vector<8x64xf32>
    %cst_10 = arith.constant 0.000000e+00 : f32
    %34 = vector.broadcast %cst_10 : f32 to vector<8x64xf32>
    %35 = vector.extract_strided_slice %13 {offsets = [0, 0], sizes = [8, 256], strides = [1, 1]} : vector<64x256xf32> to vector<8x256xf32>
    %cst_11 = arith.constant dense<0.000000e+00> : vector<8x256xf32>
    %36 = tpu.matmul %32, %31, %cst_11 {dimension_numbers = #tpu.dot_dimension_numbers<[1], [0], [0], [1], [0, 0, 1, 1], [], []>} : vector<8x64xf32>, vector<64x256xf32>, vector<8x256xf32> -> vector<8x256xf32>
    %37 = arith.addf %35, %36 : vector<8x256xf32>
    %38 = vector.extract_strided_slice %37 {offsets = [0, 0], sizes = [8, 128], strides = [1, 1]} : vector<8x256xf32> to vector<8x128xf32>
    %39 = arith.negf %38 : vector<8x128xf32>
    %40 = math.exp %39 : vector<8x128xf32>
    %cst_12 = arith.constant 1.000000e+00 : f32
    %41 = vector.broadcast %cst_12 : f32 to vector<8x128xf32>
    %42 = arith.addf %41, %40 : vector<8x128xf32>
    %43 = arith.divf %41, %42 : vector<8x128xf32>
    %44 = vector.extract_strided_slice %43 {offsets = [0, 0], sizes = [8, 64], strides = [1, 1]} : vector<8x128xf32> to vector<8x64xf32>
    %45 = vector.extract_strided_slice %43 {offsets = [0, 64], sizes = [8, 64], strides = [1, 1]} : vector<8x128xf32> to vector<8x64xf32>
    %46 = vector.extract_strided_slice %37 {offsets = [0, 128], sizes = [8, 64], strides = [1, 1]} : vector<8x256xf32> to vector<8x64xf32>
    %47 = math.tanh %46 : vector<8x64xf32>
    %48 = vector.extract_strided_slice %37 {offsets = [0, 192], sizes = [8, 64], strides = [1, 1]} : vector<8x256xf32> to vector<8x64xf32>
    %49 = arith.negf %48 : vector<8x64xf32>
    %50 = math.exp %49 : vector<8x64xf32>
    %cst_13 = arith.constant 1.000000e+00 : f32
    %51 = vector.broadcast %cst_13 : f32 to vector<8x64xf32>
    %52 = arith.addf %51, %50 : vector<8x64xf32>
    %53 = arith.divf %51, %52 : vector<8x64xf32>
    %54 = arith.mulf %45, %33 : vector<8x64xf32>
    %55 = arith.mulf %44, %47 : vector<8x64xf32>
    %56 = arith.addf %54, %55 : vector<8x64xf32>
    %57 = math.tanh %56 : vector<8x64xf32>
    %58 = arith.mulf %53, %57 : vector<8x64xf32>
    %59 = arith.maximumf %34, %58 : vector<8x64xf32>
    %60 = vector.extract_strided_slice %13 {offsets = [8, 0], sizes = [8, 256], strides = [1, 1]} : vector<64x256xf32> to vector<8x256xf32>
    %cst_14 = arith.constant dense<0.000000e+00> : vector<8x256xf32>
    %61 = tpu.matmul %58, %31, %cst_14 {dimension_numbers = #tpu.dot_dimension_numbers<[1], [0], [0], [1], [0, 0, 1, 1], [], []>} : vector<8x64xf32>, vector<64x256xf32>, vector<8x256xf32> -> vector<8x256xf32>
    %62 = arith.addf %60, %61 : vector<8x256xf32>
    %63 = vector.extract_strided_slice %62 {offsets = [0, 0], sizes = [8, 128], strides = [1, 1]} : vector<8x256xf32> to vector<8x128xf32>
    %64 = arith.negf %63 : vector<8x128xf32>
    %65 = math.exp %64 : vector<8x128xf32>
    %cst_15 = arith.constant 1.000000e+00 : f32
    %66 = vector.broadcast %cst_15 : f32 to vector<8x128xf32>
    %67 = arith.addf %66, %65 : vector<8x128xf32>
    %68 = arith.divf %66, %67 : vector<8x128xf32>
    %69 = vector.extract_strided_slice %68 {offsets = [0, 0], sizes = [8, 64], strides = [1, 1]} : vector<8x128xf32> to vector<8x64xf32>
    %70 = vector.extract_strided_slice %68 {offsets = [0, 64], sizes = [8, 64], strides = [1, 1]} : vector<8x128xf32> to vector<8x64xf32>
    %71 = vector.extract_strided_slice %62 {offsets = [0, 128], sizes = [8, 64], strides = [1, 1]} : vector<8x256xf32> to vector<8x64xf32>
    %72 = math.tanh %71 : vector<8x64xf32>
    %73 = vector.extract_strided_slice %62 {offsets = [0, 192], sizes = [8, 64], strides = [1, 1]} : vector<8x256xf32> to vector<8x64xf32>
    %74 = arith.negf %73 : vector<8x64xf32>
    %75 = math.exp %74 : vector<8x64xf32>
    %cst_16 = arith.constant 1.000000e+00 : f32
    %76 = vector.broadcast %cst_16 : f32 to vector<8x64xf32>
    %77 = arith.addf %76, %75 : vector<8x64xf32>
    %78 = arith.divf %76, %77 : vector<8x64xf32>
    %79 = arith.mulf %70, %56 : vector<8x64xf32>
    %80 = arith.mulf %69, %72 : vector<8x64xf32>
    %81 = arith.addf %79, %80 : vector<8x64xf32>
    %82 = math.tanh %81 : vector<8x64xf32>
    %83 = arith.mulf %78, %82 : vector<8x64xf32>
    %84 = arith.maximumf %59, %83 : vector<8x64xf32>
    %85 = vector.extract_strided_slice %13 {offsets = [16, 0], sizes = [8, 256], strides = [1, 1]} : vector<64x256xf32> to vector<8x256xf32>
    %cst_17 = arith.constant dense<0.000000e+00> : vector<8x256xf32>
    %86 = tpu.matmul %83, %31, %cst_17 {dimension_numbers = #tpu.dot_dimension_numbers<[1], [0], [0], [1], [0, 0, 1, 1], [], []>} : vector<8x64xf32>, vector<64x256xf32>, vector<8x256xf32> -> vector<8x256xf32>
    %87 = arith.addf %85, %86 : vector<8x256xf32>
    %88 = vector.extract_strided_slice %87 {offsets = [0, 0], sizes = [8, 128], strides = [1, 1]} : vector<8x256xf32> to vector<8x128xf32>
    %89 = arith.negf %88 : vector<8x128xf32>
    %90 = math.exp %89 : vector<8x128xf32>
    %cst_18 = arith.constant 1.000000e+00 : f32
    %91 = vector.broadcast %cst_18 : f32 to vector<8x128xf32>
    %92 = arith.addf %91, %90 : vector<8x128xf32>
    %93 = arith.divf %91, %92 : vector<8x128xf32>
    %94 = vector.extract_strided_slice %93 {offsets = [0, 0], sizes = [8, 64], strides = [1, 1]} : vector<8x128xf32> to vector<8x64xf32>
    %95 = vector.extract_strided_slice %93 {offsets = [0, 64], sizes = [8, 64], strides = [1, 1]} : vector<8x128xf32> to vector<8x64xf32>
    %96 = vector.extract_strided_slice %87 {offsets = [0, 128], sizes = [8, 64], strides = [1, 1]} : vector<8x256xf32> to vector<8x64xf32>
    %97 = math.tanh %96 : vector<8x64xf32>
    %98 = vector.extract_strided_slice %87 {offsets = [0, 192], sizes = [8, 64], strides = [1, 1]} : vector<8x256xf32> to vector<8x64xf32>
    %99 = arith.negf %98 : vector<8x64xf32>
    %100 = math.exp %99 : vector<8x64xf32>
    %cst_19 = arith.constant 1.000000e+00 : f32
    %101 = vector.broadcast %cst_19 : f32 to vector<8x64xf32>
    %102 = arith.addf %101, %100 : vector<8x64xf32>
    %103 = arith.divf %101, %102 : vector<8x64xf32>
    %104 = arith.mulf %95, %81 : vector<8x64xf32>
    %105 = arith.mulf %94, %97 : vector<8x64xf32>
    %106 = arith.addf %104, %105 : vector<8x64xf32>
    %107 = math.tanh %106 : vector<8x64xf32>
    %108 = arith.mulf %103, %107 : vector<8x64xf32>
    %109 = arith.maximumf %84, %108 : vector<8x64xf32>
    %110 = vector.extract_strided_slice %13 {offsets = [24, 0], sizes = [8, 256], strides = [1, 1]} : vector<64x256xf32> to vector<8x256xf32>
    %cst_20 = arith.constant dense<0.000000e+00> : vector<8x256xf32>
    %111 = tpu.matmul %108, %31, %cst_20 {dimension_numbers = #tpu.dot_dimension_numbers<[1], [0], [0], [1], [0, 0, 1, 1], [], []>} : vector<8x64xf32>, vector<64x256xf32>, vector<8x256xf32> -> vector<8x256xf32>
    %112 = arith.addf %110, %111 : vector<8x256xf32>
    %113 = vector.extract_strided_slice %112 {offsets = [0, 0], sizes = [8, 128], strides = [1, 1]} : vector<8x256xf32> to vector<8x128xf32>
    %114 = arith.negf %113 : vector<8x128xf32>
    %115 = math.exp %114 : vector<8x128xf32>
    %cst_21 = arith.constant 1.000000e+00 : f32
    %116 = vector.broadcast %cst_21 : f32 to vector<8x128xf32>
    %117 = arith.addf %116, %115 : vector<8x128xf32>
    %118 = arith.divf %116, %117 : vector<8x128xf32>
    %119 = vector.extract_strided_slice %118 {offsets = [0, 0], sizes = [8, 64], strides = [1, 1]} : vector<8x128xf32> to vector<8x64xf32>
    %120 = vector.extract_strided_slice %118 {offsets = [0, 64], sizes = [8, 64], strides = [1, 1]} : vector<8x128xf32> to vector<8x64xf32>
    %121 = vector.extract_strided_slice %112 {offsets = [0, 128], sizes = [8, 64], strides = [1, 1]} : vector<8x256xf32> to vector<8x64xf32>
    %122 = math.tanh %121 : vector<8x64xf32>
    %123 = vector.extract_strided_slice %112 {offsets = [0, 192], sizes = [8, 64], strides = [1, 1]} : vector<8x256xf32> to vector<8x64xf32>
    %124 = arith.negf %123 : vector<8x64xf32>
    %125 = math.exp %124 : vector<8x64xf32>
    %cst_22 = arith.constant 1.000000e+00 : f32
    %126 = vector.broadcast %cst_22 : f32 to vector<8x64xf32>
    %127 = arith.addf %126, %125 : vector<8x64xf32>
    %128 = arith.divf %126, %127 : vector<8x64xf32>
    %129 = arith.mulf %120, %106 : vector<8x64xf32>
    %130 = arith.mulf %119, %122 : vector<8x64xf32>
    %131 = arith.addf %129, %130 : vector<8x64xf32>
    %132 = math.tanh %131 : vector<8x64xf32>
    %133 = arith.mulf %128, %132 : vector<8x64xf32>
    %134 = arith.maximumf %109, %133 : vector<8x64xf32>
    %135 = vector.extract_strided_slice %13 {offsets = [32, 0], sizes = [8, 256], strides = [1, 1]} : vector<64x256xf32> to vector<8x256xf32>
    %cst_23 = arith.constant dense<0.000000e+00> : vector<8x256xf32>
    %136 = tpu.matmul %133, %31, %cst_23 {dimension_numbers = #tpu.dot_dimension_numbers<[1], [0], [0], [1], [0, 0, 1, 1], [], []>} : vector<8x64xf32>, vector<64x256xf32>, vector<8x256xf32> -> vector<8x256xf32>
    %137 = arith.addf %135, %136 : vector<8x256xf32>
    %138 = vector.extract_strided_slice %137 {offsets = [0, 0], sizes = [8, 128], strides = [1, 1]} : vector<8x256xf32> to vector<8x128xf32>
    %139 = arith.negf %138 : vector<8x128xf32>
    %140 = math.exp %139 : vector<8x128xf32>
    %cst_24 = arith.constant 1.000000e+00 : f32
    %141 = vector.broadcast %cst_24 : f32 to vector<8x128xf32>
    %142 = arith.addf %141, %140 : vector<8x128xf32>
    %143 = arith.divf %141, %142 : vector<8x128xf32>
    %144 = vector.extract_strided_slice %143 {offsets = [0, 0], sizes = [8, 64], strides = [1, 1]} : vector<8x128xf32> to vector<8x64xf32>
    %145 = vector.extract_strided_slice %143 {offsets = [0, 64], sizes = [8, 64], strides = [1, 1]} : vector<8x128xf32> to vector<8x64xf32>
    %146 = vector.extract_strided_slice %137 {offsets = [0, 128], sizes = [8, 64], strides = [1, 1]} : vector<8x256xf32> to vector<8x64xf32>
    %147 = math.tanh %146 : vector<8x64xf32>
    %148 = vector.extract_strided_slice %137 {offsets = [0, 192], sizes = [8, 64], strides = [1, 1]} : vector<8x256xf32> to vector<8x64xf32>
    %149 = arith.negf %148 : vector<8x64xf32>
    %150 = math.exp %149 : vector<8x64xf32>
    %cst_25 = arith.constant 1.000000e+00 : f32
    %151 = vector.broadcast %cst_25 : f32 to vector<8x64xf32>
    %152 = arith.addf %151, %150 : vector<8x64xf32>
    %153 = arith.divf %151, %152 : vector<8x64xf32>
    %154 = arith.mulf %145, %131 : vector<8x64xf32>
    %155 = arith.mulf %144, %147 : vector<8x64xf32>
    %156 = arith.addf %154, %155 : vector<8x64xf32>
    %157 = math.tanh %156 : vector<8x64xf32>
    %158 = arith.mulf %153, %157 : vector<8x64xf32>
    %159 = arith.maximumf %134, %158 : vector<8x64xf32>
    %160 = vector.extract_strided_slice %13 {offsets = [40, 0], sizes = [8, 256], strides = [1, 1]} : vector<64x256xf32> to vector<8x256xf32>
    %cst_26 = arith.constant dense<0.000000e+00> : vector<8x256xf32>
    %161 = tpu.matmul %158, %31, %cst_26 {dimension_numbers = #tpu.dot_dimension_numbers<[1], [0], [0], [1], [0, 0, 1, 1], [], []>} : vector<8x64xf32>, vector<64x256xf32>, vector<8x256xf32> -> vector<8x256xf32>
    %162 = arith.addf %160, %161 : vector<8x256xf32>
    %163 = vector.extract_strided_slice %162 {offsets = [0, 0], sizes = [8, 128], strides = [1, 1]} : vector<8x256xf32> to vector<8x128xf32>
    %164 = arith.negf %163 : vector<8x128xf32>
    %165 = math.exp %164 : vector<8x128xf32>
    %cst_27 = arith.constant 1.000000e+00 : f32
    %166 = vector.broadcast %cst_27 : f32 to vector<8x128xf32>
    %167 = arith.addf %166, %165 : vector<8x128xf32>
    %168 = arith.divf %166, %167 : vector<8x128xf32>
    %169 = vector.extract_strided_slice %168 {offsets = [0, 0], sizes = [8, 64], strides = [1, 1]} : vector<8x128xf32> to vector<8x64xf32>
    %170 = vector.extract_strided_slice %168 {offsets = [0, 64], sizes = [8, 64], strides = [1, 1]} : vector<8x128xf32> to vector<8x64xf32>
    %171 = vector.extract_strided_slice %162 {offsets = [0, 128], sizes = [8, 64], strides = [1, 1]} : vector<8x256xf32> to vector<8x64xf32>
    %172 = math.tanh %171 : vector<8x64xf32>
    %173 = vector.extract_strided_slice %162 {offsets = [0, 192], sizes = [8, 64], strides = [1, 1]} : vector<8x256xf32> to vector<8x64xf32>
    %174 = arith.negf %173 : vector<8x64xf32>
    %175 = math.exp %174 : vector<8x64xf32>
    %cst_28 = arith.constant 1.000000e+00 : f32
    %176 = vector.broadcast %cst_28 : f32 to vector<8x64xf32>
    %177 = arith.addf %176, %175 : vector<8x64xf32>
    %178 = arith.divf %176, %177 : vector<8x64xf32>
    %179 = arith.mulf %170, %156 : vector<8x64xf32>
    %180 = arith.mulf %169, %172 : vector<8x64xf32>
    %181 = arith.addf %179, %180 : vector<8x64xf32>
    %182 = math.tanh %181 : vector<8x64xf32>
    %183 = arith.mulf %178, %182 : vector<8x64xf32>
    %184 = arith.maximumf %159, %183 : vector<8x64xf32>
    %185 = vector.extract_strided_slice %13 {offsets = [48, 0], sizes = [8, 256], strides = [1, 1]} : vector<64x256xf32> to vector<8x256xf32>
    %cst_29 = arith.constant dense<0.000000e+00> : vector<8x256xf32>
    %186 = tpu.matmul %183, %31, %cst_29 {dimension_numbers = #tpu.dot_dimension_numbers<[1], [0], [0], [1], [0, 0, 1, 1], [], []>} : vector<8x64xf32>, vector<64x256xf32>, vector<8x256xf32> -> vector<8x256xf32>
    %187 = arith.addf %185, %186 : vector<8x256xf32>
    %188 = vector.extract_strided_slice %187 {offsets = [0, 0], sizes = [8, 128], strides = [1, 1]} : vector<8x256xf32> to vector<8x128xf32>
    %189 = arith.negf %188 : vector<8x128xf32>
    %190 = math.exp %189 : vector<8x128xf32>
    %cst_30 = arith.constant 1.000000e+00 : f32
    %191 = vector.broadcast %cst_30 : f32 to vector<8x128xf32>
    %192 = arith.addf %191, %190 : vector<8x128xf32>
    %193 = arith.divf %191, %192 : vector<8x128xf32>
    %194 = vector.extract_strided_slice %193 {offsets = [0, 0], sizes = [8, 64], strides = [1, 1]} : vector<8x128xf32> to vector<8x64xf32>
    %195 = vector.extract_strided_slice %193 {offsets = [0, 64], sizes = [8, 64], strides = [1, 1]} : vector<8x128xf32> to vector<8x64xf32>
    %196 = vector.extract_strided_slice %187 {offsets = [0, 128], sizes = [8, 64], strides = [1, 1]} : vector<8x256xf32> to vector<8x64xf32>
    %197 = math.tanh %196 : vector<8x64xf32>
    %198 = vector.extract_strided_slice %187 {offsets = [0, 192], sizes = [8, 64], strides = [1, 1]} : vector<8x256xf32> to vector<8x64xf32>
    %199 = arith.negf %198 : vector<8x64xf32>
    %200 = math.exp %199 : vector<8x64xf32>
    %cst_31 = arith.constant 1.000000e+00 : f32
    %201 = vector.broadcast %cst_31 : f32 to vector<8x64xf32>
    %202 = arith.addf %201, %200 : vector<8x64xf32>
    %203 = arith.divf %201, %202 : vector<8x64xf32>
    %204 = arith.mulf %195, %181 : vector<8x64xf32>
    %205 = arith.mulf %194, %197 : vector<8x64xf32>
    %206 = arith.addf %204, %205 : vector<8x64xf32>
    %207 = math.tanh %206 : vector<8x64xf32>
    %208 = arith.mulf %203, %207 : vector<8x64xf32>
    %209 = arith.maximumf %184, %208 : vector<8x64xf32>
    %210 = vector.extract_strided_slice %13 {offsets = [56, 0], sizes = [8, 256], strides = [1, 1]} : vector<64x256xf32> to vector<8x256xf32>
    %cst_32 = arith.constant dense<0.000000e+00> : vector<8x256xf32>
    %211 = tpu.matmul %208, %31, %cst_32 {dimension_numbers = #tpu.dot_dimension_numbers<[1], [0], [0], [1], [0, 0, 1, 1], [], []>} : vector<8x64xf32>, vector<64x256xf32>, vector<8x256xf32> -> vector<8x256xf32>
    %212 = arith.addf %210, %211 : vector<8x256xf32>
    %213 = vector.extract_strided_slice %212 {offsets = [0, 0], sizes = [8, 128], strides = [1, 1]} : vector<8x256xf32> to vector<8x128xf32>
    %214 = arith.negf %213 : vector<8x128xf32>
    %215 = math.exp %214 : vector<8x128xf32>
    %cst_33 = arith.constant 1.000000e+00 : f32
    %216 = vector.broadcast %cst_33 : f32 to vector<8x128xf32>
    %217 = arith.addf %216, %215 : vector<8x128xf32>
    %218 = arith.divf %216, %217 : vector<8x128xf32>
    %219 = vector.extract_strided_slice %218 {offsets = [0, 0], sizes = [8, 64], strides = [1, 1]} : vector<8x128xf32> to vector<8x64xf32>
    %220 = vector.extract_strided_slice %218 {offsets = [0, 64], sizes = [8, 64], strides = [1, 1]} : vector<8x128xf32> to vector<8x64xf32>
    %221 = vector.extract_strided_slice %212 {offsets = [0, 128], sizes = [8, 64], strides = [1, 1]} : vector<8x256xf32> to vector<8x64xf32>
    %222 = math.tanh %221 : vector<8x64xf32>
    %223 = vector.extract_strided_slice %212 {offsets = [0, 192], sizes = [8, 64], strides = [1, 1]} : vector<8x256xf32> to vector<8x64xf32>
    %224 = arith.negf %223 : vector<8x64xf32>
    %225 = math.exp %224 : vector<8x64xf32>
    %cst_34 = arith.constant 1.000000e+00 : f32
    %226 = vector.broadcast %cst_34 : f32 to vector<8x64xf32>
    %227 = arith.addf %226, %225 : vector<8x64xf32>
    %228 = arith.divf %226, %227 : vector<8x64xf32>
    %229 = arith.mulf %220, %206 : vector<8x64xf32>
    %230 = arith.mulf %219, %222 : vector<8x64xf32>
    %231 = arith.addf %229, %230 : vector<8x64xf32>
    %232 = math.tanh %231 : vector<8x64xf32>
    %233 = arith.mulf %228, %232 : vector<8x64xf32>
    %234 = arith.maximumf %209, %233 : vector<8x64xf32>
    %c0_35 = arith.constant 0 : index
    %c0_36 = arith.constant 0 : index
    %235 = vector.load %arg4[%c0_35, %c0_36] : memref<96x4xf32, #tpu.memory_space<vmem>>, vector<32x4xf32>
    %cst_37 = arith.constant dense<0.000000e+00> : vector<8x4xf32>
    %236 = tpu.matmul %30, %235, %cst_37 {dimension_numbers = #tpu.dot_dimension_numbers<[1], [0], [0], [1], [0, 0, 1, 1], [], []>} : vector<8x32xf32>, vector<32x4xf32>, vector<8x4xf32> -> vector<8x4xf32>
    %c32 = arith.constant 32 : index
    %c0_38 = arith.constant 0 : index
    %237 = vector.load %arg4[%c32, %c0_38] : memref<96x4xf32, #tpu.memory_space<vmem>>, vector<64x4xf32>
    %cst_39 = arith.constant dense<0.000000e+00> : vector<8x4xf32>
    %238 = tpu.matmul %234, %237, %cst_39 {dimension_numbers = #tpu.dot_dimension_numbers<[1], [0], [0], [1], [0, 0, 1, 1], [], []>} : vector<8x64xf32>, vector<64x4xf32>, vector<8x4xf32> -> vector<8x4xf32>
    %239 = arith.addf %236, %238 : vector<8x4xf32>
    %c0_40 = arith.constant 0 : index
    %c0_41 = arith.constant 0 : index
    %240 = vector.load %arg5[%c0_40, %c0_41] : memref<1x4xf32, #tpu.memory_space<vmem>>, vector<1x4xf32>
    %241 = vector.broadcast %240 : vector<1x4xf32> to vector<8x4xf32>
    %242 = arith.addf %239, %241 : vector<8x4xf32>
    %243 = vector.extract_strided_slice %242 {offsets = [0, 0], sizes = [2, 4], strides = [1, 1]} : vector<8x4xf32> to vector<2x4xf32>
    %c0_42 = arith.constant 0 : index
    %c0_43 = arith.constant 0 : index
    %244 = vector.load %arg6[%c0_42, %c0_43] : memref<2x4xf32, #tpu.memory_space<vmem>>, vector<2x4xf32>
    tpu.vector_store %arg6[%c0_42, %c0_43], %243 {strides = array<i32>} : memref<2x4xf32, #tpu.memory_space<vmem>>, vector<2x4xf32>,
    return
  }
}

</mosaic_0001>

<llo_original>
// kernel: tpu_custom_call.1
$region0: #{tpu_custom_call.1}
  #allocation0 [shape = 'u32[]', space=smem, size = 0x4, offset = 0x4, fixed_abs, tag = 'smem constant byte address 0x4 - core index']
  #allocation1 [shape = 'u32[72,128]{1,0:T(1,128)}', space=vmem, size = 0x9000, scoped, tag = 'internal scratch']
  %s0 = inlined_call_operand.vmem [shape: s32[64,1], index: 0, kind: input, shape index: {}]
  %s1 = inlined_call_operand.vmem [shape: s32[64,1], index: 1, kind: input, shape index: {}]
  %s2 = inlined_call_operand.hbm [shape: f32[128,384], index: 2, kind: input, shape index: {}]
  %s3 = inlined_call_operand.vmem [shape: f32[64,256], index: 3, kind: input, shape index: {}]
  %s4 = inlined_call_operand.vmem [shape: f32[96,4], index: 4, kind: input, shape index: {}]
  %s5 = inlined_call_operand.vmem [shape: f32[1,4], index: 5, kind: input, shape index: {}]
  %s6 = inlined_call_operand.hbm [shape: f32[2,4], index: 6, kind: output, shape index: {}]
  %s7 = sld [smem:[#allocation0]]
  $region38: #{tpu_custom_call.1} parent=0
    _
  %s9 = ssub.s32 1, %s7
  %s10 = scalar_select 0, %s9, %s7
  $region1: #{tpu_custom_call.1} parent=0
    #allocation2 [shape = 'u8[196608]{0}', space=vmem, size = 0x30000, scoped, tag = 'input window, operand 2, single buffered']
    #allocation3 [shape = 's32[1]{0}', space=sflag, size = 0x4, scoped, tag = 'scoped memory for tpu_custom_call.1']
    #allocation4 [shape = 's32[1]{0}', space=sflag, size = 0x4, scoped, tag = 'scoped memory for tpu_custom_call.1']
    #allocation5 [shape = 'u8[1024]{0}', space=vmem, size = 0x400, scoped, tag = 'output window, operand 0, single buffered']
    %11 = vsyncpa [#allocation3], 0
    %12 = vsyncpa [#allocation4], 0
    // Predicated region
    $region2: #{tpu_custom_call.1} parent=1 // pred_check
      _
    $region3: #{tpu_custom_call.1} parent=1 // pred_check_branch
      %14 = sbr.rel (0) target = $region5
    $region4: #{tpu_custom_call.1} parent=1 // pred_region
      _
    $region5: #{tpu_custom_call.1} parent=1 // pred_fallthru
      _
    // Predicated region
    $region6: #{tpu_custom_call.1} parent=1 // pred_check
      _
    $region7: #{tpu_custom_call.1} parent=1 // pred_check_branch
      %16 = sbr.rel (0) target = $region9
    $region8: #{tpu_custom_call.1} parent=1 // pred_region
      _
    $region9: #{tpu_custom_call.1} parent=1 // pred_fallthru
      _
    // Predicated region
    $region10: #{tpu_custom_call.1} parent=1 // pred_check
      _
    $region11: #{tpu_custom_call.1} parent=1 // pred_check_branch
      %18 = sbr.rel (0) target = $region13
    $region12: #{tpu_custom_call.1} parent=1 // pred_region
      %20 = vsyncadd [#allocation3], 0
      %s21 = sshll.u32 %s2, 4
      %s22 = int_to_ptr.hbm [resolvable:$true] %s21
      %s23 = sshll.u32 [#allocation2], 4
      %s24 = int_to_ptr.vmem [resolvable:$true] %s23
      %29 = dma.hbm_to_vmem [thread:$0]  %s22, 6144, %s24, [#allocation3], 384, 384, 24
    $region13: #{tpu_custom_call.1} parent=1 // pred_fallthru
      _
    // Predicated region
    $region14: #{tpu_custom_call.1} parent=1 // pred_check
      _
    $region15: #{tpu_custom_call.1} parent=1 // pred_check_branch
      %31 = sbr.rel (0) target = $region17
    $region16: #{tpu_custom_call.1} parent=1 // pred_region
      _
    $region17: #{tpu_custom_call.1} parent=1 // pred_fallthru
      _
    // Predicated region
    $region18: #{tpu_custom_call.1} parent=1 // pred_check
      _
    $region19: #{tpu_custom_call.1} parent=1 // pred_check_branch
      %33 = sbr.rel (0) target = $region21
    $region20: #{tpu_custom_call.1} parent=1 // pred_region
      _
    $region21: #{tpu_custom_call.1} parent=1 // pred_fallthru
      _
    // Predicated region
    $region22: #{tpu_custom_call.1} parent=1 // pred_check
      _
    $region23: #{tpu_custom_call.1} parent=1 // pred_check_branch
      %35 = sbr.rel (0) target = $region25
    $region24: #{tpu_custom_call.1} parent=1 // pred_region
      _
    $region25: #{tpu_custom_call.1} parent=1 // pred_fallthru
      _
    // Predicated region
    $region26: #{tpu_custom_call.1} parent=1 // pred_check
      _
    $region27: #{tpu_custom_call.1} parent=1 // pred_check_branch
      %37 = sbr.rel (0) target = $region29
    $region28: #{tpu_custom_call.1} parent=1 // pred_region
      %39 = dma.done [#allocation3], 6144
    $region29: #{tpu_custom_call.1} parent=1 // pred_fallthru
      _
    %v40 = vlaneseq
    %v41 = vand.u32 %v40, 127
    %v42 = vld [vmem:[%s0] sm:$0xff]
    %v43 = vld [vmem:[%s0 + $0x8] sm:$0xff]
    %v44 = vld [vmem:[%s0 + $0x10] sm:$0xff]
    %v45 = vld [vmem:[%s0 + $0x18] sm:$0xff]
    %v46 = vld [vmem:[%s0 + $0x20] sm:$0xff]
    %v47 = vld [vmem:[%s0 + $0x28] sm:$0xff]
    %v48 = vld [vmem:[%s0 + $0x30] sm:$0xff]
    %v49 = vld [vmem:[%s0 + $0x38] sm:$0xff]
    %50 = vset.pattern.permute.xlu0 0
    %51 = vperm.xlu0 %50, %v42
    %v52 = vpop.permute.xlu0 %51
    %53 = vset.pattern.permute.xlu0 0
    %54 = vperm.xlu0 %53, %v43
    %v55 = vpop.permute.xlu0 %54
    %56 = vset.pattern.permute.xlu0 0
    %57 = vperm.xlu0 %56, %v44
    %v58 = vpop.permute.xlu0 %57
    %59 = vset.pattern.permute.xlu0 0
    %60 = vperm.xlu0 %59, %v45
    %v61 = vpop.permute.xlu0 %60
    %62 = vset.pattern.permute.xlu0 0
    %63 = vperm.xlu0 %62, %v46
    %v64 = vpop.permute.xlu0 %63
    %65 = vset.pattern.permute.xlu0 0
    %66 = vperm.xlu0 %65, %v47
    %v67 = vpop.permute.xlu0 %66
    %68 = vset.pattern.permute.xlu0 0
    %69 = vperm.xlu0 %68, %v48
    %v70 = vpop.permute.xlu0 %69
    %71 = vset.pattern.permute.xlu0 0
    %72 = vperm.xlu0 %71, %v49
    %v73 = vpop.permute.xlu0 %72
    %vm74 = vcmp.eq.s32.totalorder %v41, %v52
    %vm75 = vcmp.eq.s32.totalorder %v41, %v55
    %vm76 = vcmp.eq.s32.totalorder %v41, %v58
    %vm77 = vcmp.eq.s32.totalorder %v41, %v61
    %vm78 = vcmp.eq.s32.totalorder %v41, %v64
    %vm79 = vcmp.eq.s32.totalorder %v41, %v67
    %vm80 = vcmp.eq.s32.totalorder %v41, %v70
    %vm81 = vcmp.eq.s32.totalorder %v41, %v73
    %v82 = vld [vmem:[%s1] sm:$0xff]
    %v83 = vld [vmem:[%s1 + $0x8] sm:$0xff]
    %v84 = vld [vmem:[%s1 + $0x10] sm:$0xff]
    %v85 = vld [vmem:[%s1 + $0x18] sm:$0xff]
    %v86 = vld [vmem:[%s1 + $0x20] sm:$0xff]
    %v87 = vld [vmem:[%s1 + $0x28] sm:$0xff]
    %v88 = vld [vmem:[%s1 + $0x30] sm:$0xff]
    %v89 = vld [vmem:[%s1 + $0x38] sm:$0xff]
    %90 = vset.pattern.permute.xlu0 0
    %91 = vperm.xlu0 %90, %v82
    %v92 = vpop.permute.xlu0 %91
    %93 = vset.pattern.permute.xlu0 0
    %94 = vperm.xlu0 %93, %v83
    %v95 = vpop.permute.xlu0 %94
    %96 = vset.pattern.permute.xlu0 0
    %97 = vperm.xlu0 %96, %v84
    %v98 = vpop.permute.xlu0 %97
    %99 = vset.pattern.permute.xlu0 0
    %100 = vperm.xlu0 %99, %v85
    %v101 = vpop.permute.xlu0 %100
    %102 = vset.pattern.permute.xlu0 0
    %103 = vperm.xlu0 %102, %v86
    %v104 = vpop.permute.xlu0 %103
    %105 = vset.pattern.permute.xlu0 0
    %106 = vperm.xlu0 %105, %v87
    %v107 = vpop.permute.xlu0 %106
    %108 = vset.pattern.permute.xlu0 0
    %109 = vperm.xlu0 %108, %v88
    %v110 = vpop.permute.xlu0 %109
    %111 = vset.pattern.permute.xlu0 0
    %112 = vperm.xlu0 %111, %v89
    %v113 = vpop.permute.xlu0 %112
    %vm114 = vcmp.eq.s32.totalorder %v41, %v92
    %vm115 = vcmp.eq.s32.totalorder %v41, %v95
    %vm116 = vcmp.eq.s32.totalorder %v41, %v98
    %vm117 = vcmp.eq.s32.totalorder %v41, %v101
    %vm118 = vcmp.eq.s32.totalorder %v41, %v104
    %vm119 = vcmp.eq.s32.totalorder %v41, %v107
    %vm120 = vcmp.eq.s32.totalorder %v41, %v110
    %vm121 = vcmp.eq.s32.totalorder %v41, %v113
    %vm122 = vmor %vm74, %vm114
    %vm123 = vmor %vm75, %vm115
    %vm124 = vmor %vm76, %vm116
    %vm125 = vmor %vm77, %vm117
    %vm126 = vmor %vm78, %vm118
    %vm127 = vmor %vm79, %vm119
    %vm128 = vmor %vm80, %vm120
    %vm129 = vmor %vm81, %vm121
    %v130 = vsel %vm122, 1, 0
    %v131 = vsel %vm123, 1, 0
    %v132 = vsel %vm124, 1, 0
    %v133 = vsel %vm125, 1, 0
    %v134 = vsel %vm126, 1, 0
    %v135 = vsel %vm127, 1, 0
    %v136 = vsel %vm128, 1, 0
    %v137 = vsel %vm129, 1, 0
    %v138 = vcvt.s32.f32 %v130
    %v139 = vcvt.s32.f32 %v131
    %v140 = vcvt.s32.f32 %v132
    %v141 = vcvt.s32.f32 %v133
    %v142 = vcvt.s32.f32 %v134
    %v143 = vcvt.s32.f32 %v135
    %v144 = vcvt.s32.f32 %v136
    %v145 = vcvt.s32.f32 %v137
    %v146 = vld [vmem:[#allocation2] sm:$0xff]
    %v147 = vld [vmem:[#allocation2 + $0x8] sm:$0xff]
    %v148 = vld [vmem:[#allocation2 + $0x10] sm:$0xff]
    %v149 = vld [vmem:[#allocation2 + $0x18] sm:$0xff]
    %v150 = vld [vmem:[#allocation2 + $0x20] sm:$0xff]
    %v151 = vld [vmem:[#allocation2 + $0x28] sm:$0xff]
    %v152 = vld [vmem:[#allocation2 + $0x30] sm:$0xff]
    %v153 = vld [vmem:[#allocation2 + $0x38] sm:$0xff]
    %v154 = vld [vmem:[#allocation2 + $0x40] sm:$0xff]
    %v155 = vld [vmem:[#allocation2 + $0x48] sm:$0xff]
    %v156 = vld [vmem:[#allocation2 + $0x50] sm:$0xff]
    %v157 = vld [vmem:[#allocation2 + $0x58] sm:$0xff]
    %v158 = vld [vmem:[#allocation2 + $0x60] sm:$0xff]
    %v159 = vld [vmem:[#allocation2 + $0x68] sm:$0xff]
    %v160 = vld [vmem:[#allocation2 + $0x70] sm:$0xff]
    %v161 = vld [vmem:[#allocation2 + $0x78] sm:$0xff]
    %v162 = vld [vmem:[#allocation2 + $0x80] sm:$0xff]
    %v163 = vld [vmem:[#allocation2 + $0x88] sm:$0xff]
    %v164 = vld [vmem:[#allocation2 + $0x90] sm:$0xff]
    %v165 = vld [vmem:[#allocation2 + $0x98] sm:$0xff]
    %v166 = vld [vmem:[#allocation2 + $0xa0] sm:$0xff]
    %v167 = vld [vmem:[#allocation2 + $0xa8] sm:$0xff]
    %v168 = vld [vmem:[#allocation2 + $0xb0] sm:$0xff]
    %v169 = vld [vmem:[#allocation2 + $0xb8] sm:$0xff]
    %v170 = vld [vmem:[#allocation2 + $0xc0] sm:$0xff]
    %v171 = vld [vmem:[#allocation2 + $0xc8] sm:$0xff]
    %v172 = vld [vmem:[#allocation2 + $0xd0] sm:$0xff]
    %v173 = vld [vmem:[#allocation2 + $0xd8] sm:$0xff]
    %v174 = vld [vmem:[#allocation2 + $0xe0] sm:$0xff]
    %v175 = vld [vmem:[#allocation2 + $0xe8] sm:$0xff]
    %v176 = vld [vmem:[#allocation2 + $0xf0] sm:$0xff]
    %v177 = vld [vmem:[#allocation2 + $0xf8] sm:$0xff]
    %v178 = vld [vmem:[#allocation2 + $0x100] sm:$0xff]
    %v179 = vld [vmem:[#allocation2 + $0x108] sm:$0xff]
    %v180 = vld [vmem:[#allocation2 + $0x110] sm:$0xff]
    %v181 = vld [vmem:[#allocation2 + $0x118] sm:$0xff]
    %v182 = vld [vmem:[#allocation2 + $0x120] sm:$0xff]
    %v183 = vld [vmem:[#allocation2 + $0x128] sm:$0xff]
    %v184 = vld [vmem:[#allocation2 + $0x130] sm:$0xff]
    %v185 = vld [vmem:[#allocation2 + $0x138] sm:$0xff]
    %v186 = vld [vmem:[#allocation2 + $0x140] sm:$0xff]
    %v187 = vld [vmem:[#allocation2 + $0x148] sm:$0xff]
    %v188 = vld [vmem:[#allocation2 + $0x150] sm:$0xff]
    %v189 = vld [vmem:[#allocation2 + $0x158] sm:$0xff]
    %v190 = vld [vmem:[#allocation2 + $0x160] sm:$0xff]
    %v191 = vld [vmem:[#allocation2 + $0x168] sm:$0xff]
    %v192 = vld [vmem:[#allocation2 + $0x170] sm:$0xff]
    %v193 = vld [vmem:[#allocation2 + $0x178] sm:$0xff]
    %194 = vmatpush.msra.mxu0 %v191
    %195 = vmatpush.msra.mxu0 %v188
    %196 = vmatpush.msra.mxu0 %v185
    %197 = vmatpush.msra.mxu0 %v182
    %198 = vmatpush.msra.mxu0 %v179
    %199 = vmatpush.msra.mxu0 %v176
    %200 = vmatpush.msra.mxu0 %v173
    %201 = vmatpush.msra.mxu0 %v170
    %202 = vmatpush.msra.mxu0 %v167
    %203 = vmatpush.msra.mxu0 %v164
    %204 = vmatpush.msra.mxu0 %v161
    %205 = vmatpush.msra.mxu0 %v158
    %206 = vmatpush.msra.mxu0 %v155
    %207 = vmatpush.msra.mxu0 %v152
    %208 = vmatpush.msra.mxu0 %v149
    %209 = vmatpush.msra.mxu0 %v146
    %210 = vmatmul.f32.gmra.mxu0 %v138
    %v211 = vpop.f32.mrf.mxu0
    %v212 = vadd.f32 0.0, %v211
    %213 = vmatmul.f32.gmra.mxu0 %v139
    %v214 = vpop.f32.mrf.mxu0
    %v215 = vadd.f32 0.0, %v214
    %216 = vmatmul.f32.gmra.mxu0 %v140
    %v217 = vpop.f32.mrf.mxu0
    %v218 = vadd.f32 0.0, %v217
    %219 = vmatmul.f32.gmra.mxu0 %v141
    %v220 = vpop.f32.mrf.mxu0
    %v221 = vadd.f32 0.0, %v220
    %222 = vmatmul.f32.gmra.mxu0 %v142
    %v223 = vpop.f32.mrf.mxu0
    %v224 = vadd.f32 0.0, %v223
    %225 = vmatmul.f32.gmra.mxu0 %v143
    %v226 = vpop.f32.mrf.mxu0
    %v227 = vadd.f32 0.0, %v226
    %228 = vmatmul.f32.gmra.mxu0 %v144
    %v229 = vpop.f32.mrf.mxu0
    %v230 = vadd.f32 0.0, %v229
    %231 = vmatmul.f32.gmra.mxu0 %v145
    %v232 = vpop.f32.mrf.mxu0
    %v233 = vadd.f32 0.0, %v232
    %234 = vdwg.mxu0
    %235 = vmatpush.msra.mxu0 %v192
    %236 = vmatpush.msra.mxu0 %v189
    %237 = vmatpush.msra.mxu0 %v186
    %238 = vmatpush.msra.mxu0 %v183
    %239 = vmatpush.msra.mxu0 %v180
    %240 = vmatpush.msra.mxu0 %v177
    %241 = vmatpush.msra.mxu0 %v174
    %242 = vmatpush.msra.mxu0 %v171
    %243 = vmatpush.msra.mxu0 %v168
    %244 = vmatpush.msra.mxu0 %v165
    %245 = vmatpush.msra.mxu0 %v162
    %246 = vmatpush.msra.mxu0 %v159
    %247 = vmatpush.msra.mxu0 %v156
    %248 = vmatpush.msra.mxu0 %v153
    %249 = vmatpush.msra.mxu0 %v150
    %250 = vmatpush.msra.mxu0 %v147
    %251 = vmatmul.f32.gmra.mxu0 %v138
    %v252 = vpop.f32.mrf.mxu0
    %v253 = vadd.f32 0.0, %v252
    %254 = vmatmul.f32.gmra.mxu0 %v139
    %v255 = vpop.f32.mrf.mxu0
    %v256 = vadd.f32 0.0, %v255
    %257 = vmatmul.f32.gmra.mxu0 %v140
    %v258 = vpop.f32.mrf.mxu0
    %v259 = vadd.f32 0.0, %v258
    %260 = vmatmul.f32.gmra.mxu0 %v141
    %v261 = vpop.f32.mrf.mxu0
    %v262 = vadd.f32 0.0, %v261
    %263 = vmatmul.f32.gmra.mxu0 %v142
    %v264 = vpop.f32.mrf.mxu0
    %v265 = vadd.f32 0.0, %v264
    %266 = vmatmul.f32.gmra.mxu0 %v143
    %v267 = vpop.f32.mrf.mxu0
    %v268 = vadd.f32 0.0, %v267
    %269 = vmatmul.f32.gmra.mxu0 %v144
    %v270 = vpop.f32.mrf.mxu0
    %v271 = vadd.f32 0.0, %v270
    %272 = vmatmul.f32.gmra.mxu0 %v145
    %v273 = vpop.f32.mrf.mxu0
    %v274 = vadd.f32 0.0, %v273
    %275 = vdwg.mxu0
    %276 = vmatpush.msra.mxu0 %v193
    %277 = vmatpush.msra.mxu0 %v190
    %278 = vmatpush.msra.mxu0 %v187
    %279 = vmatpush.msra.mxu0 %v184
    %280 = vmatpush.msra.mxu0 %v181
    %281 = vmatpush.msra.mxu0 %v178
    %282 = vmatpush.msra.mxu0 %v175
    %283 = vmatpush.msra.mxu0 %v172
    %284 = vmatpush.msra.mxu0 %v169
    %285 = vmatpush.msra.mxu0 %v166
    %286 = vmatpush.msra.mxu0 %v163
    %287 = vmatpush.msra.mxu0 %v160
    %288 = vmatpush.msra.mxu0 %v157
    %289 = vmatpush.msra.mxu0 %v154
    %290 = vmatpush.msra.mxu0 %v151
    %291 = vmatpush.msra.mxu0 %v148
    %292 = vmatmul.f32.gmra.mxu0 %v138
    %v293 = vpop.f32.mrf.mxu0
    %v294 = vadd.f32 0.0, %v293
    %295 = vmatmul.f32.gmra.mxu0 %v139
    %v296 = vpop.f32.mrf.mxu0
    %v297 = vadd.f32 0.0, %v296
    %298 = vmatmul.f32.gmra.mxu0 %v140
    %v299 = vpop.f32.mrf.mxu0
    %v300 = vadd.f32 0.0, %v299
    %301 = vmatmul.f32.gmra.mxu0 %v141
    %v302 = vpop.f32.mrf.mxu0
    %v303 = vadd.f32 0.0, %v302
    %304 = vmatmul.f32.gmra.mxu0 %v142
    %v305 = vpop.f32.mrf.mxu0
    %v306 = vadd.f32 0.0, %v305
    %307 = vmatmul.f32.gmra.mxu0 %v143
    %v308 = vpop.f32.mrf.mxu0
    %v309 = vadd.f32 0.0, %v308
    %310 = vmatmul.f32.gmra.mxu0 %v144
    %v311 = vpop.f32.mrf.mxu0
    %v312 = vadd.f32 0.0, %v311
    %313 = vmatmul.f32.gmra.mxu0 %v145
    %v314 = vpop.f32.mrf.mxu0
    %v315 = vadd.f32 0.0, %v314
    %316 = vdwg.mxu0
    %v317 = vmax.f32 %v212, 0.0
    %v318 = vmax.f32 %v317, %v215
    %v319 = vmax.f32 %v318, %v218
    %v320 = vmax.f32 %v319, %v221
    %v321 = vmax.f32 %v320, %v224
    %v322 = vmax.f32 %v321, %v227
    %v323 = vmax.f32 %v322, %v230
    %v324 = vmax.f32 %v323, %v233
    %v325 = vld [vmem:[%s3] sm:$0xff]
    %v326 = vld [vmem:[%s3 + $0x8] sm:$0xff]
    %v327 = vld [vmem:[%s3 + $0x10] sm:$0xff]
    %v328 = vld [vmem:[%s3 + $0x18] sm:$0xff]
    %v329 = vld [vmem:[%s3 + $0x20] sm:$0xff]
    %v330 = vld [vmem:[%s3 + $0x28] sm:$0xff]
    %v331 = vld [vmem:[%s3 + $0x30] sm:$0xff]
    %v332 = vld [vmem:[%s3 + $0x38] sm:$0xff]
    %v333 = vld [vmem:[%s3 + $0x40] sm:$0xff]
    %v334 = vld [vmem:[%s3 + $0x48] sm:$0xff]
    %v335 = vld [vmem:[%s3 + $0x50] sm:$0xff]
    %v336 = vld [vmem:[%s3 + $0x58] sm:$0xff]
    %v337 = vld [vmem:[%s3 + $0x60] sm:$0xff]
    %v338 = vld [vmem:[%s3 + $0x68] sm:$0xff]
    %v339 = vld [vmem:[%s3 + $0x70] sm:$0xff]
    %v340 = vld [vmem:[%s3 + $0x78] sm:$0xff]
    %vm341 = vcmask 523264
    %v343 = vsel %vm341, 0.0, 0
    %345 = vmatpush.msra.mxu0 0.0
    %346 = vmatpush.msra.mxu0 0.0
    %347 = vmatpush.msra.mxu0 0.0
    %348 = vmatpush.msra.mxu0 0.0
    %349 = vmatpush.msra.mxu0 0.0
    %350 = vmatpush.msra.mxu0 0.0
    %351 = vmatpush.msra.mxu0 0.0
    %352 = vmatpush.msra.mxu0 0.0
    %353 = vmatpush.msra.mxu0 %v339
    %354 = vmatpush.msra.mxu0 %v337
    %355 = vmatpush.msra.mxu0 %v335
    %356 = vmatpush.msra.mxu0 %v333
    %357 = vmatpush.msra.mxu0 %v331
    %358 = vmatpush.msra.mxu0 %v329
    %359 = vmatpush.msra.mxu0 %v327
    %360 = vmatpush.msra.mxu0 %v325
    %361 = vmatmul.f32.gmra.mxu0 %v343
    %v362 = vpop.f32.mrf.mxu0
    %v363 = vadd.f32 0.0, %v362
    %364 = vdwg.mxu0
    %365 = vmatpush.msra.mxu0 0.0
    %366 = vmatpush.msra.mxu0 0.0
    %367 = vmatpush.msra.mxu0 0.0
    %368 = vmatpush.msra.mxu0 0.0
    %369 = vmatpush.msra.mxu0 0.0
    %370 = vmatpush.msra.mxu0 0.0
    %371 = vmatpush.msra.mxu0 0.0
    %372 = vmatpush.msra.mxu0 0.0
    %373 = vmatpush.msra.mxu0 %v340
    %374 = vmatpush.msra.mxu0 %v338
    %375 = vmatpush.msra.mxu0 %v336
    %376 = vmatpush.msra.mxu0 %v334
    %377 = vmatpush.msra.mxu0 %v332
    %378 = vmatpush.msra.mxu0 %v330
    %379 = vmatpush.msra.mxu0 %v328
    %380 = vmatpush.msra.mxu0 %v326
    %381 = vmatmul.f32.gmra.mxu0 %v343
    %v382 = vpop.f32.mrf.mxu0
    %v383 = vadd.f32 0.0, %v382
    %384 = vdwg.mxu0
    %v385 = vadd.f32 %v253, %v363
    %v386 = vadd.f32 %v294, %v383
    %v387 = vxor.u32 %v385, 2147483648
    %v388 = vmul.f32 %v387, 1.442695
    %v389 = vpow.pop %v388
    %v390 = vadd.f32 %v389, 1.0
    %v391 = vrcp.pop %v390
    %v392 = vmul.f32 %v390, %v391
    %v393 = vsub.f32 1.0, %v392
    %v394 = vmul.f32 %v391, %v393
    %v395 = vadd.f32 %v391, %v394
    %vm396 = vweird.f32 %v390
    %vm397 = vweird.f32 %v391
    %vm398 = vmor %vm396, %vm397
    %v399 = vsel %vm398, %v391, %v395
    %v400 = vand.u32 2147483647, %v390
    %vm401 = vcmp.eq.f32.partialorder %v400, 8.507059e+37
    %v402 = vand.u32 %v390, 2147483648
    %v403 = vor.u32 1.1754944e-38, %v402
    %v404 = vsel %vm401, %v403, %v399
    %v405 = vmul.f32 1.0, %v404
    %v406 = vtanh.pop %v386
    %v407 = vxor.u32 %v386, 2147483648
    %v408 = vmul.f32 %v407, 1.442695
    %v409 = vpow.pop %v408
    %v410 = vadd.f32 %v409, 1.0
    %v411 = vrcp.pop %v410
    %v412 = vmul.f32 %v410, %v411
    %v413 = vsub.f32 1.0, %v412
    %v414 = vmul.f32 %v411, %v413
    %v415 = vadd.f32 %v411, %v414
    %vm416 = vweird.f32 %v410
    %vm417 = vweird.f32 %v411
    %vm418 = vmor %vm416, %vm417
    %v419 = vsel %vm418, %v411, %v415
    %v420 = vand.u32 2147483647, %v410
    %vm421 = vcmp.eq.f32.partialorder %v420, 8.507059e+37
    %v422 = vand.u32 %v410, 2147483648
    %v423 = vor.u32 1.1754944e-38, %v422
    %v424 = vsel %vm421, %v423, %v419
    %v425 = vmul.f32 1.0, %v424
    %v426 = vmul.f32 %v405, 0.0
    %v427 = vmul.f32 %v405, %v406
    %429 = vrot.lane.b32.xlu0 %v427, 64
    %v430 = vpop.permute.xlu0 %429
    %v432 = vadd.f32 %v426, %v430
    %v433 = vtanh.pop %v432
    %v434 = vmul.f32 %v425, %v433
    %v435 = vmax.f32 %v434, 0.0
    %437 = vrot.lane.b32.xlu0 %v434, 64
    %v438 = vpop.permute.xlu0 %437
    %v439 = vsel %vm341, %v438, 0
    %441 = vmatpush.msra.mxu0 0.0
    %442 = vmatpush.msra.mxu0 0.0
    %443 = vmatpush.msra.mxu0 0.0
    %444 = vmatpush.msra.mxu0 0.0
    %445 = vmatpush.msra.mxu0 0.0
    %446 = vmatpush.msra.mxu0 0.0
    %447 = vmatpush.msra.mxu0 0.0
    %448 = vmatpush.msra.mxu0 0.0
    %449 = vmatpush.msra.mxu0 %v339
    %450 = vmatpush.msra.mxu0 %v337
    %451 = vmatpush.msra.mxu0 %v335
    %452 = vmatpush.msra.mxu0 %v333
    %453 = vmatpush.msra.mxu0 %v331
    %454 = vmatpush.msra.mxu0 %v329
    %455 = vmatpush.msra.mxu0 %v327
    %456 = vmatpush.msra.mxu0 %v325
    %457 = vmatmul.f32.gmra.mxu0 %v439
    %v458 = vpop.f32.mrf.mxu0
    %v459 = vadd.f32 0.0, %v458
    %460 = vdwg.mxu0
    %461 = vmatpush.msra.mxu0 0.0
    %462 = vmatpush.msra.mxu0 0.0
    %463 = vmatpush.msra.mxu0 0.0
    %464 = vmatpush.msra.mxu0 0.0
    %465 = vmatpush.msra.mxu0 0.0
    %466 = vmatpush.msra.mxu0 0.0
    %467 = vmatpush.msra.mxu0 0.0
    %468 = vmatpush.msra.mxu0 0.0
    %469 = vmatpush.msra.mxu0 %v340
    %470 = vmatpush.msra.mxu0 %v338
    %471 = vmatpush.msra.mxu0 %v336
    %472 = vmatpush.msra.mxu0 %v334
    %473 = vmatpush.msra.mxu0 %v332
    %474 = vmatpush.msra.mxu0 %v330
    %475 = vmatpush.msra.mxu0 %v328
    %476 = vmatpush.msra.mxu0 %v326
    %477 = vmatmul.f32.gmra.mxu0 %v439
    %v478 = vpop.f32.mrf.mxu0
    %v479 = vadd.f32 0.0, %v478
    %480 = vdwg.mxu0
    %v481 = vadd.f32 %v256, %v459
    %v482 = vadd.f32 %v297, %v479
    %v483 = vxor.u32 %v481, 2147483648
    %v484 = vmul.f32 %v483, 1.442695
    %v485 = vpow.pop %v484
    %v486 = vadd.f32 %v485, 1.0
    %v487 = vrcp.pop %v486
    %v488 = vmul.f32 %v486, %v487
    %v489 = vsub.f32 1.0, %v488
    %v490 = vmul.f32 %v487, %v489
    %v491 = vadd.f32 %v487, %v490
    %vm492 = vweird.f32 %v486
    %vm493 = vweird.f32 %v487
    %vm494 = vmor %vm492, %vm493
    %v495 = vsel %vm494, %v487, %v491
    %v496 = vand.u32 2147483647, %v486
    %vm497 = vcmp.eq.f32.partialorder %v496, 8.507059e+37
    %v498 = vand.u32 %v486, 2147483648
    %v499 = vor.u32 1.1754944e-38, %v498
    %v500 = vsel %vm497, %v499, %v495
    %v501 = vmul.f32 1.0, %v500
    %v502 = vtanh.pop %v482
    %v503 = vxor.u32 %v482, 2147483648
    %v504 = vmul.f32 %v503, 1.442695
    %v505 = vpow.pop %v504
    %v506 = vadd.f32 %v505, 1.0
    %v507 = vrcp.pop %v506
    %v508 = vmul.f32 %v506, %v507
    %v509 = vsub.f32 1.0, %v508
    %v510 = vmul.f32 %v507, %v509
    %v511 = vadd.f32 %v507, %v510
    %vm512 = vweird.f32 %v506
    %vm513 = vweird.f32 %v507
    %vm514 = vmor %vm512, %vm513
    %v515 = vsel %vm514, %v507, %v511
    %v516 = vand.u32 2147483647, %v506
    %vm517 = vcmp.eq.f32.partialorder %v516, 8.507059e+37
    %v518 = vand.u32 %v506, 2147483648
    %v519 = vor.u32 1.1754944e-38, %v518
    %v520 = vsel %vm517, %v519, %v515
    %v521 = vmul.f32 1.0, %v520
    %v522 = vmul.f32 %v501, %v432
    %v523 = vmul.f32 %v501, %v502
    %525 = vrot.lane.b32.xlu0 %v523, 64
    %v526 = vpop.permute.xlu0 %525
    %v528 = vadd.f32 %v522, %v526
    %v529 = vtanh.pop %v528
    %v530 = vmul.f32 %v521, %v529
    %v531 = vmax.f32 %v435, %v530
    %533 = vrot.lane.b32.xlu0 %v530, 64
    %v534 = vpop.permute.xlu0 %533
    %v535 = vsel %vm341, %v534, 0
    %537 = vmatpush.msra.mxu0 0.0
    %538 = vmatpush.msra.mxu0 0.0
    %539 = vmatpush.msra.mxu0 0.0
    %540 = vmatpush.msra.mxu0 0.0
    %541 = vmatpush.msra.mxu0 0.0
    %542 = vmatpush.msra.mxu0 0.0
    %543 = vmatpush.msra.mxu0 0.0
    %544 = vmatpush.msra.mxu0 0.0
    %545 = vmatpush.msra.mxu0 %v339
    %546 = vmatpush.msra.mxu0 %v337
    %547 = vmatpush.msra.mxu0 %v335
    %548 = vmatpush.msra.mxu0 %v333
    %549 = vmatpush.msra.mxu0 %v331
    %550 = vmatpush.msra.mxu0 %v329
    %551 = vmatpush.msra.mxu0 %v327
    %552 = vmatpush.msra.mxu0 %v325
    %553 = vmatmul.f32.gmra.mxu0 %v535
    %v554 = vpop.f32.mrf.mxu0
    %v555 = vadd.f32 0.0, %v554
    %556 = vdwg.mxu0
    %557 = vmatpush.msra.mxu0 0.0
    %558 = vmatpush.msra.mxu0 0.0
    %559 = vmatpush.msra.mxu0 0.0
    %560 = vmatpush.msra.mxu0 0.0
    %561 = vmatpush.msra.mxu0 0.0
    %562 = vmatpush.msra.mxu0 0.0
    %563 = vmatpush.msra.mxu0 0.0
    %564 = vmatpush.msra.mxu0 0.0
    %565 = vmatpush.msra.mxu0 %v340
    %566 = vmatpush.msra.mxu0 %v338
    %567 = vmatpush.msra.mxu0 %v336
    %568 = vmatpush.msra.mxu0 %v334
    %569 = vmatpush.msra.mxu0 %v332
    %570 = vmatpush.msra.mxu0 %v330
    %571 = vmatpush.msra.mxu0 %v328
    %572 = vmatpush.msra.mxu0 %v326
    %573 = vmatmul.f32.gmra.mxu0 %v535
    %v574 = vpop.f32.mrf.mxu0
    %v575 = vadd.f32 0.0, %v574
    %576 = vdwg.mxu0
    %v577 = vadd.f32 %v259, %v555
    %v578 = vadd.f32 %v300, %v575
    %v579 = vxor.u32 %v577, 2147483648
    %v580 = vmul.f32 %v579, 1.442695
    %v581 = vpow.pop %v580
    %v582 = vadd.f32 %v581, 1.0
    %v583 = vrcp.pop %v582
    %v584 = vmul.f32 %v582, %v583
    %v585 = vsub.f32 1.0, %v584
    %v586 = vmul.f32 %v583, %v585
    %v587 = vadd.f32 %v583, %v586
    %vm588 = vweird.f32 %v582
    %vm589 = vweird.f32 %v583
    %vm590 = vmor %vm588, %vm589
    %v591 = vsel %vm590, %v583, %v587
    %v592 = vand.u32 2147483647, %v582
    %vm593 = vcmp.eq.f32.partialorder %v592, 8.507059e+37
    %v594 = vand.u32 %v582, 2147483648
    %v595 = vor.u32 1.1754944e-38, %v594
    %v596 = vsel %vm593, %v595, %v591
    %v597 = vmul.f32 1.0, %v596
    %v598 = vtanh.pop %v578
    %v599 = vxor.u32 %v578, 2147483648
    %v600 = vmul.f32 %v599, 1.442695
    %v601 = vpow.pop %v600
    %v602 = vadd.f32 %v601, 1.0
    %v603 = vrcp.pop %v602
    %v604 = vmul.f32 %v602, %v603
    %v605 = vsub.f32 1.0, %v604
    %v606 = vmul.f32 %v603, %v605
    %v607 = vadd.f32 %v603, %v606
    %vm608 = vweird.f32 %v602
    %vm609 = vweird.f32 %v603
    %vm610 = vmor %vm608, %vm609
    %v611 = vsel %vm610, %v603, %v607
    %v612 = vand.u32 2147483647, %v602
    %vm613 = vcmp.eq.f32.partialorder %v612, 8.507059e+37
    %v614 = vand.u32 %v602, 2147483648
    %v615 = vor.u32 1.1754944e-38, %v614
    %v616 = vsel %vm613, %v615, %v611
    %v617 = vmul.f32 1.0, %v616
    %v618 = vmul.f32 %v597, %v528
    %v619 = vmul.f32 %v597, %v598
    %621 = vrot.lane.b32.xlu0 %v619, 64
    %v622 = vpop.permute.xlu0 %621
    %v624 = vadd.f32 %v618, %v622
    %v625 = vtanh.pop %v624
    %v626 = vmul.f32 %v617, %v625
    %v627 = vmax.f32 %v531, %v626
    %629 = vrot.lane.b32.xlu0 %v626, 64
    %v630 = vpop.permute.xlu0 %629
    %v631 = vsel %vm341, %v630, 0
    %633 = vmatpush.msra.mxu0 0.0
    %634 = vmatpush.msra.mxu0 0.0
    %635 = vmatpush.msra.mxu0 0.0
    %636 = vmatpush.msra.mxu0 0.0
    %637 = vmatpush.msra.mxu0 0.0
    %638 = vmatpush.msra.mxu0 0.0
    %639 = vmatpush.msra.mxu0 0.0
    %640 = vmatpush.msra.mxu0 0.0
    %641 = vmatpush.msra.mxu0 %v339
    %642 = vmatpush.msra.mxu0 %v337
    %643 = vmatpush.msra.mxu0 %v335
    %644 = vmatpush.msra.mxu0 %v333
    %645 = vmatpush.msra.mxu0 %v331
    %646 = vmatpush.msra.mxu0 %v329
    %647 = vmatpush.msra.mxu0 %v327
    %648 = vmatpush.msra.mxu0 %v325
    %649 = vmatmul.f32.gmra.mxu0 %v631
    %v650 = vpop.f32.mrf.mxu0
    %v651 = vadd.f32 0.0, %v650
    %652 = vdwg.mxu0
    %653 = vmatpush.msra.mxu0 0.0
    %654 = vmatpush.msra.mxu0 0.0
    %655 = vmatpush.msra.mxu0 0.0
    %656 = vmatpush.msra.mxu0 0.0
    %657 = vmatpush.msra.mxu0 0.0
    %658 = vmatpush.msra.mxu0 0.0
    %659 = vmatpush.msra.mxu0 0.0
    %660 = vmatpush.msra.mxu0 0.0
    %661 = vmatpush.msra.mxu0 %v340
    %662 = vmatpush.msra.mxu0 %v338
    %663 = vmatpush.msra.mxu0 %v336
    %664 = vmatpush.msra.mxu0 %v334
    %665 = vmatpush.msra.mxu0 %v332
    %666 = vmatpush.msra.mxu0 %v330
    %667 = vmatpush.msra.mxu0 %v328
    %668 = vmatpush.msra.mxu0 %v326
    %669 = vmatmul.f32.gmra.mxu0 %v631
    %v670 = vpop.f32.mrf.mxu0
    %v671 = vadd.f32 0.0, %v670
    %672 = vdwg.mxu0
    %v673 = vadd.f32 %v262, %v651
    %v674 = vadd.f32 %v303, %v671
    %v675 = vxor.u32 %v673, 2147483648
    %v676 = vmul.f32 %v675, 1.442695
    %v677 = vpow.pop %v676
    %v678 = vadd.f32 %v677, 1.0
    %v679 = vrcp.pop %v678
    %v680 = vmul.f32 %v678, %v679
    %v681 = vsub.f32 1.0, %v680
    %v682 = vmul.f32 %v679, %v681
    %v683 = vadd.f32 %v679, %v682
    %vm684 = vweird.f32 %v678
    %vm685 = vweird.f32 %v679
    %vm686 = vmor %vm684, %vm685
    %v687 = vsel %vm686, %v679, %v683
    %v688 = vand.u32 2147483647, %v678
    %vm689 = vcmp.eq.f32.partialorder %v688, 8.507059e+37
    %v690 = vand.u32 %v678, 2147483648
    %v691 = vor.u32 1.1754944e-38, %v690
    %v692 = vsel %vm689, %v691, %v687
    %v693 = vmul.f32 1.0, %v692
    %v694 = vtanh.pop %v674
    %v695 = vxor.u32 %v674, 2147483648
    %v696 = vmul.f32 %v695, 1.442695
    %v697 = vpow.pop %v696
    %v698 = vadd.f32 %v697, 1.0
    %v699 = vrcp.pop %v698
    %v700 = vmul.f32 %v698, %v699
    %v701 = vsub.f32 1.0, %v700
    %v702 = vmul.f32 %v699, %v701
    %v703 = vadd.f32 %v699, %v702
    %vm704 = vweird.f32 %v698
    %vm705 = vweird.f32 %v699
    %vm706 = vmor %vm704, %vm705
    %v707 = vsel %vm706, %v699, %v703
    %v708 = vand.u32 2147483647, %v698
    %vm709 = vcmp.eq.f32.partialorder %v708, 8.507059e+37
    %v710 = vand.u32 %v698, 2147483648
    %v711 = vor.u32 1.1754944e-38, %v710
    %v712 = vsel %vm709, %v711, %v707
    %v713 = vmul.f32 1.0, %v712
    %v714 = vmul.f32 %v693, %v624
    %v715 = vmul.f32 %v693, %v694
    %717 = vrot.lane.b32.xlu0 %v715, 64
    %v718 = vpop.permute.xlu0 %717
    %v720 = vadd.f32 %v714, %v718
    %v721 = vtanh.pop %v720
    %v722 = vmul.f32 %v713, %v721
    %v723 = vmax.f32 %v627, %v722
    %725 = vrot.lane.b32.xlu0 %v722, 64
    %v726 = vpop.permute.xlu0 %725
    %v727 = vsel %vm341, %v726, 0
    %729 = vmatpush.msra.mxu0 0.0
    %730 = vmatpush.msra.mxu0 0.0
    %731 = vmatpush.msra.mxu0 0.0
    %732 = vmatpush.msra.mxu0 0.0
    %733 = vmatpush.msra.mxu0 0.0
    %734 = vmatpush.msra.mxu0 0.0
    %735 = vmatpush.msra.mxu0 0.0
    %736 = vmatpush.msra.mxu0 0.0
    %737 = vmatpush.msra.mxu0 %v339
    %738 = vmatpush.msra.mxu0 %v337
    %739 = vmatpush.msra.mxu0 %v335
    %740 = vmatpush.msra.mxu0 %v333
    %741 = vmatpush.msra.mxu0 %v331
    %742 = vmatpush.msra.mxu0 %v329
    %743 = vmatpush.msra.mxu0 %v327
    %744 = vmatpush.msra.mxu0 %v325
    %745 = vmatmul.f32.gmra.mxu0 %v727
    %v746 = vpop.f32.mrf.mxu0
    %v747 = vadd.f32 0.0, %v746
    %748 = vdwg.mxu0
    %749 = vmatpush.msra.mxu0 0.0
    %750 = vmatpush.msra.mxu0 0.0
    %751 = vmatpush.msra.mxu0 0.0
    %752 = vmatpush.msra.mxu0 0.0
    %753 = vmatpush.msra.mxu0 0.0
    %754 = vmatpush.msra.mxu0 0.0
    %755 = vmatpush.msra.mxu0 0.0
    %756 = vmatpush.msra.mxu0 0.0
    %757 = vmatpush.msra.mxu0 %v340
    %758 = vmatpush.msra.mxu0 %v338
    %759 = vmatpush.msra.mxu0 %v336
    %760 = vmatpush.msra.mxu0 %v334
    %761 = vmatpush.msra.mxu0 %v332
    %762 = vmatpush.msra.mxu0 %v330
    %763 = vmatpush.msra.mxu0 %v328
    %764 = vmatpush.msra.mxu0 %v326
    %765 = vmatmul.f32.gmra.mxu0 %v727
    %v766 = vpop.f32.mrf.mxu0
    %v767 = vadd.f32 0.0, %v766
    %768 = vdwg.mxu0
    %v769 = vadd.f32 %v265, %v747
    %v770 = vadd.f32 %v306, %v767
    %v771 = vxor.u32 %v769, 2147483648
    %v772 = vmul.f32 %v771, 1.442695
    %v773 = vpow.pop %v772
    %v774 = vadd.f32 %v773, 1.0
    %v775 = vrcp.pop %v774
    %v776 = vmul.f32 %v774, %v775
    %v777 = vsub.f32 1.0, %v776
    %v778 = vmul.f32 %v775, %v777
    %v779 = vadd.f32 %v775, %v778
    %vm780 = vweird.f32 %v774
    %vm781 = vweird.f32 %v775
    %vm782 = vmor %vm780, %vm781
    %v783 = vsel %vm782, %v775, %v779
    %v784 = vand.u32 2147483647, %v774
    %vm785 = vcmp.eq.f32.partialorder %v784, 8.507059e+37
    %v786 = vand.u32 %v774, 2147483648
    %v787 = vor.u32 1.1754944e-38, %v786
    %v788 = vsel %vm785, %v787, %v783
    %v789 = vmul.f32 1.0, %v788
    %v790 = vtanh.pop %v770
    %v791 = vxor.u32 %v770, 2147483648
    %v792 = vmul.f32 %v791, 1.442695
    %v793 = vpow.pop %v792
    %v794 = vadd.f32 %v793, 1.0
    %v795 = vrcp.pop %v794
    %v796 = vmul.f32 %v794, %v795
    %v797 = vsub.f32 1.0, %v796
    %v798 = vmul.f32 %v795, %v797
    %v799 = vadd.f32 %v795, %v798
    %vm800 = vweird.f32 %v794
    %vm801 = vweird.f32 %v795
    %vm802 = vmor %vm800, %vm801
    %v803 = vsel %vm802, %v795, %v799
    %v804 = vand.u32 2147483647, %v794
    %vm805 = vcmp.eq.f32.partialorder %v804, 8.507059e+37
    %v806 = vand.u32 %v794, 2147483648
    %v807 = vor.u32 1.1754944e-38, %v806
    %v808 = vsel %vm805, %v807, %v803
    %v809 = vmul.f32 1.0, %v808
    %v810 = vmul.f32 %v789, %v720
    %v811 = vmul.f32 %v789, %v790
    %813 = vrot.lane.b32.xlu0 %v811, 64
    %v814 = vpop.permute.xlu0 %813
    %v816 = vadd.f32 %v810, %v814
    %v817 = vtanh.pop %v816
    %v818 = vmul.f32 %v809, %v817
    %v819 = vmax.f32 %v723, %v818
    %821 = vrot.lane.b32.xlu0 %v818, 64
    %v822 = vpop.permute.xlu0 %821
    %v823 = vsel %vm341, %v822, 0
    %825 = vmatpush.msra.mxu0 0.0
    %826 = vmatpush.msra.mxu0 0.0
    %827 = vmatpush.msra.mxu0 0.0
    %828 = vmatpush.msra.mxu0 0.0
    %829 = vmatpush.msra.mxu0 0.0
    %830 = vmatpush.msra.mxu0 0.0
    %831 = vmatpush.msra.mxu0 0.0
    %832 = vmatpush.msra.mxu0 0.0
    %833 = vmatpush.msra.mxu0 %v339
    %834 = vmatpush.msra.mxu0 %v337
    %835 = vmatpush.msra.mxu0 %v335
    %836 = vmatpush.msra.mxu0 %v333
    %837 = vmatpush.msra.mxu0 %v331
    %838 = vmatpush.msra.mxu0 %v329
    %839 = vmatpush.msra.mxu0 %v327
    %840 = vmatpush.msra.mxu0 %v325
    %841 = vmatmul.f32.gmra.mxu0 %v823
    %v842 = vpop.f32.mrf.mxu0
    %v843 = vadd.f32 0.0, %v842
    %844 = vdwg.mxu0
    %845 = vmatpush.msra.mxu0 0.0
    %846 = vmatpush.msra.mxu0 0.0
    %847 = vmatpush.msra.mxu0 0.0
    %848 = vmatpush.msra.mxu0 0.0
    %849 = vmatpush.msra.mxu0 0.0
    %850 = vmatpush.msra.mxu0 0.0
    %851 = vmatpush.msra.mxu0 0.0
    %852 = vmatpush.msra.mxu0 0.0
    %853 = vmatpush.msra.mxu0 %v340
    %854 = vmatpush.msra.mxu0 %v338
    %855 = vmatpush.msra.mxu0 %v336
    %856 = vmatpush.msra.mxu0 %v334
    %857 = vmatpush.msra.mxu0 %v332
    %858 = vmatpush.msra.mxu0 %v330
    %859 = vmatpush.msra.mxu0 %v328
    %860 = vmatpush.msra.mxu0 %v326
    %861 = vmatmul.f32.gmra.mxu0 %v823
    %v862 = vpop.f32.mrf.mxu0
    %v863 = vadd.f32 0.0, %v862
    %864 = vdwg.mxu0
    %v865 = vadd.f32 %v268, %v843
    %v866 = vadd.f32 %v309, %v863
    %v867 = vxor.u32 %v865, 2147483648
    %v868 = vmul.f32 %v867, 1.442695
    %v869 = vpow.pop %v868
    %v870 = vadd.f32 %v869, 1.0
    %v871 = vrcp.pop %v870
    %v872 = vmul.f32 %v870, %v871
    %v873 = vsub.f32 1.0, %v872
    %v874 = vmul.f32 %v871, %v873
    %v875 = vadd.f32 %v871, %v874
    %vm876 = vweird.f32 %v870
    %vm877 = vweird.f32 %v871
    %vm878 = vmor %vm876, %vm877
    %v879 = vsel %vm878, %v871, %v875
    %v880 = vand.u32 2147483647, %v870
    %vm881 = vcmp.eq.f32.partialorder %v880, 8.507059e+37
    %v882 = vand.u32 %v870, 2147483648
    %v883 = vor.u32 1.1754944e-38, %v882
    %v884 = vsel %vm881, %v883, %v879
    %v885 = vmul.f32 1.0, %v884
    %v886 = vtanh.pop %v866
    %v887 = vxor.u32 %v866, 2147483648
    %v888 = vmul.f32 %v887, 1.442695
    %v889 = vpow.pop %v888
    %v890 = vadd.f32 %v889, 1.0
    %v891 = vrcp.pop %v890
    %v892 = vmul.f32 %v890, %v891
    %v893 = vsub.f32 1.0, %v892
    %v894 = vmul.f32 %v891, %v893
    %v895 = vadd.f32 %v891, %v894
    %vm896 = vweird.f32 %v890
    %vm897 = vweird.f32 %v891
    %vm898 = vmor %vm896, %vm897
    %v899 = vsel %vm898, %v891, %v895
    %v900 = vand.u32 2147483647, %v890
    %vm901 = vcmp.eq.f32.partialorder %v900, 8.507059e+37
    %v902 = vand.u32 %v890, 2147483648
    %v903 = vor.u32 1.1754944e-38, %v902
    %v904 = vsel %vm901, %v903, %v899
    %v905 = vmul.f32 1.0, %v904
    %v906 = vmul.f32 %v885, %v816
    %v907 = vmul.f32 %v885, %v886
    %909 = vrot.lane.b32.xlu0 %v907, 64
    %v910 = vpop.permute.xlu0 %909
    %v912 = vadd.f32 %v906, %v910
    %v913 = vtanh.pop %v912
    %v914 = vmul.f32 %v905, %v913
    %v915 = vmax.f32 %v819, %v914
    %917 = vrot.lane.b32.xlu0 %v914, 64
    %v918 = vpop.permute.xlu0 %917
    %v919 = vsel %vm341, %v918, 0
    %921 = vmatpush.msra.mxu0 0.0
    %922 = vmatpush.msra.mxu0 0.0
    %923 = vmatpush.msra.mxu0 0.0
    %924 = vmatpush.msra.mxu0 0.0
    %925 = vmatpush.msra.mxu0 0.0
    %926 = vmatpush.msra.mxu0 0.0
    %927 = vmatpush.msra.mxu0 0.0
    %928 = vmatpush.msra.mxu0 0.0
    %929 = vmatpush.msra.mxu0 %v339
    %930 = vmatpush.msra.mxu0 %v337
    %931 = vmatpush.msra.mxu0 %v335
    %932 = vmatpush.msra.mxu0 %v333
    %933 = vmatpush.msra.mxu0 %v331
    %934 = vmatpush.msra.mxu0 %v329
    %935 = vmatpush.msra.mxu0 %v327
    %936 = vmatpush.msra.mxu0 %v325
    %937 = vmatmul.f32.gmra.mxu0 %v919
    %v938 = vpop.f32.mrf.mxu0
    %v939 = vadd.f32 0.0, %v938
    %940 = vdwg.mxu0
    %941 = vmatpush.msra.mxu0 0.0
    %942 = vmatpush.msra.mxu0 0.0
    %943 = vmatpush.msra.mxu0 0.0
    %944 = vmatpush.msra.mxu0 0.0
    %945 = vmatpush.msra.mxu0 0.0
    %946 = vmatpush.msra.mxu0 0.0
    %947 = vmatpush.msra.mxu0 0.0
    %948 = vmatpush.msra.mxu0 0.0
    %949 = vmatpush.msra.mxu0 %v340
    %950 = vmatpush.msra.mxu0 %v338
    %951 = vmatpush.msra.mxu0 %v336
    %952 = vmatpush.msra.mxu0 %v334
    %953 = vmatpush.msra.mxu0 %v332
    %954 = vmatpush.msra.mxu0 %v330
    %955 = vmatpush.msra.mxu0 %v328
    %956 = vmatpush.msra.mxu0 %v326
    %957 = vmatmul.f32.gmra.mxu0 %v919
    %v958 = vpop.f32.mrf.mxu0
    %v959 = vadd.f32 0.0, %v958
    %960 = vdwg.mxu0
    %v961 = vadd.f32 %v271, %v939
    %v962 = vadd.f32 %v312, %v959
    %v963 = vxor.u32 %v961, 2147483648
    %v964 = vmul.f32 %v963, 1.442695
    %v965 = vpow.pop %v964
    %v966 = vadd.f32 %v965, 1.0
    %v967 = vrcp.pop %v966
    %v968 = vmul.f32 %v966, %v967
    %v969 = vsub.f32 1.0, %v968
    %v970 = vmul.f32 %v967, %v969
    %v971 = vadd.f32 %v967, %v970
    %vm972 = vweird.f32 %v966
    %vm973 = vweird.f32 %v967
    %vm974 = vmor %vm972, %vm973
    %v975 = vsel %vm974, %v967, %v971
    %v976 = vand.u32 2147483647, %v966
    %vm977 = vcmp.eq.f32.partialorder %v976, 8.507059e+37
    %v978 = vand.u32 %v966, 2147483648
    %v979 = vor.u32 1.1754944e-38, %v978
    %v980 = vsel %vm977, %v979, %v975
    %v981 = vmul.f32 1.0, %v980
    %v982 = vtanh.pop %v962
    %v983 = vxor.u32 %v962, 2147483648
    %v984 = vmul.f32 %v983, 1.442695
    %v985 = vpow.pop %v984
    %v986 = vadd.f32 %v985, 1.0
    %v987 = vrcp.pop %v986
    %v988 = vmul.f32 %v986, %v987
    %v989 = vsub.f32 1.0, %v988
    %v990 = vmul.f32 %v987, %v989
    %v991 = vadd.f32 %v987, %v990
    %vm992 = vweird.f32 %v986
    %vm993 = vweird.f32 %v987
    %vm994 = vmor %vm992, %vm993
    %v995 = vsel %vm994, %v987, %v991
    %v996 = vand.u32 2147483647, %v986
    %vm997 = vcmp.eq.f32.partialorder %v996, 8.507059e+37
    %v998 = vand.u32 %v986, 2147483648
    %v999 = vor.u32 1.1754944e-38, %v998
    %v1000 = vsel %vm997, %v999, %v995
    %v1001 = vmul.f32 1.0, %v1000
    %v1002 = vmul.f32 %v981, %v912
    %v1003 = vmul.f32 %v981, %v982
    %1005 = vrot.lane.b32.xlu0 %v1003, 64
    %v1006 = vpop.permute.xlu0 %1005
    %v1008 = vadd.f32 %v1002, %v1006
    %v1009 = vtanh.pop %v1008
    %v1010 = vmul.f32 %v1001, %v1009
    %v1011 = vmax.f32 %v915, %v1010
    %1013 = vrot.lane.b32.xlu0 %v1010, 64
    %v1014 = vpop.permute.xlu0 %1013
    %v1015 = vsel %vm341, %v1014, 0
    %1017 = vmatpush.msra.mxu0 0.0
    %1018 = vmatpush.msra.mxu0 0.0
    %1019 = vmatpush.msra.mxu0 0.0
    %1020 = vmatpush.msra.mxu0 0.0
    %1021 = vmatpush.msra.mxu0 0.0
    %1022 = vmatpush.msra.mxu0 0.0
    %1023 = vmatpush.msra.mxu0 0.0
    %1024 = vmatpush.msra.mxu0 0.0
    %1025 = vmatpush.msra.mxu0 %v339
    %1026 = vmatpush.msra.mxu0 %v337
    %1027 = vmatpush.msra.mxu0 %v335
    %1028 = vmatpush.msra.mxu0 %v333
    %1029 = vmatpush.msra.mxu0 %v331
    %1030 = vmatpush.msra.mxu0 %v329
    %1031 = vmatpush.msra.mxu0 %v327
    %1032 = vmatpush.msra.mxu0 %v325
    %1033 = vmatmul.f32.gmra.mxu0 %v1015
    %v1034 = vpop.f32.mrf.mxu0
    %v1035 = vadd.f32 0.0, %v1034
    %1036 = vdwg.mxu0
    %1037 = vmatpush.msra.mxu0 0.0
    %1038 = vmatpush.msra.mxu0 0.0
    %1039 = vmatpush.msra.mxu0 0.0
    %1040 = vmatpush.msra.mxu0 0.0
    %1041 = vmatpush.msra.mxu0 0.0
    %1042 = vmatpush.msra.mxu0 0.0
    %1043 = vmatpush.msra.mxu0 0.0
    %1044 = vmatpush.msra.mxu0 0.0
    %1045 = vmatpush.msra.mxu0 %v340
    %1046 = vmatpush.msra.mxu0 %v338
    %1047 = vmatpush.msra.mxu0 %v336
    %1048 = vmatpush.msra.mxu0 %v334
    %1049 = vmatpush.msra.mxu0 %v332
    %1050 = vmatpush.msra.mxu0 %v330
    %1051 = vmatpush.msra.mxu0 %v328
    %1052 = vmatpush.msra.mxu0 %v326
    %1053 = vmatmul.f32.gmra.mxu0 %v1015
    %v1054 = vpop.f32.mrf.mxu0
    %v1055 = vadd.f32 0.0, %v1054
    %1056 = vdwg.mxu0
    %v1057 = vadd.f32 %v274, %v1035
    %v1058 = vadd.f32 %v315, %v1055
    %v1059 = vxor.u32 %v1057, 2147483648
    %v1060 = vmul.f32 %v1059, 1.442695
    %v1061 = vpow.pop %v1060
    %v1062 = vadd.f32 %v1061, 1.0
    %v1063 = vrcp.pop %v1062
    %v1064 = vmul.f32 %v1062, %v1063
    %v1065 = vsub.f32 1.0, %v1064
    %v1066 = vmul.f32 %v1063, %v1065
    %v1067 = vadd.f32 %v1063, %v1066
    %vm1068 = vweird.f32 %v1062
    %vm1069 = vweird.f32 %v1063
    %vm1070 = vmor %vm1068, %vm1069
    %v1071 = vsel %vm1070, %v1063, %v1067
    %v1072 = vand.u32 2147483647, %v1062
    %vm1073 = vcmp.eq.f32.partialorder %v1072, 8.507059e+37
    %v1074 = vand.u32 %v1062, 2147483648
    %v1075 = vor.u32 1.1754944e-38, %v1074
    %v1076 = vsel %vm1073, %v1075, %v1071
    %v1077 = vmul.f32 1.0, %v1076
    %v1078 = vtanh.pop %v1058
    %v1079 = vxor.u32 %v1058, 2147483648
    %v1080 = vmul.f32 %v1079, 1.442695
    %v1081 = vpow.pop %v1080
    %v1082 = vadd.f32 %v1081, 1.0
    %v1083 = vrcp.pop %v1082
    %v1084 = vmul.f32 %v1082, %v1083
    %v1085 = vsub.f32 1.0, %v1084
    %v1086 = vmul.f32 %v1083, %v1085
    %v1087 = vadd.f32 %v1083, %v1086
    %vm1088 = vweird.f32 %v1082
    %vm1089 = vweird.f32 %v1083
    %vm1090 = vmor %vm1088, %vm1089
    %v1091 = vsel %vm1090, %v1083, %v1087
    %v1092 = vand.u32 2147483647, %v1082
    %vm1093 = vcmp.eq.f32.partialorder %v1092, 8.507059e+37
    %v1094 = vand.u32 %v1082, 2147483648
    %v1095 = vor.u32 1.1754944e-38, %v1094
    %v1096 = vsel %vm1093, %v1095, %v1091
    %v1097 = vmul.f32 1.0, %v1096
    %v1098 = vmul.f32 %v1077, %v1008
    %v1099 = vmul.f32 %v1077, %v1078
    %1101 = vrot.lane.b32.xlu0 %v1099, 64
    %v1102 = vpop.permute.xlu0 %1101
    %v1104 = vadd.f32 %v1098, %v1102
    %v1105 = vtanh.pop %v1104
    %v1106 = vmul.f32 %v1097, %v1105
    %v1107 = vmax.f32 %v1011, %v1106
    %v1108 = vld [vmem:[%s4] sm:$0xff]
    %v1109 = vld [vmem:[%s4 + $0x8] sm:$0xff]
    %v1110 = vld [vmem:[%s4 + $0x10] sm:$0xff]
    %v1111 = vld [vmem:[%s4 + $0x18] sm:$0xff]
    %v1112 = vld [vmem:[%s4 + $0x20] sm:$0xff]
    %v1113 = vld [vmem:[%s4 + $0x28] sm:$0xff]
    %v1114 = vld [vmem:[%s4 + $0x30] sm:$0xff]
    %v1115 = vld [vmem:[%s4 + $0x38] sm:$0xff]
    %v1116 = vld [vmem:[%s4 + $0x40] sm:$0xff]
    %v1117 = vld [vmem:[%s4 + $0x48] sm:$0xff]
    %v1118 = vld [vmem:[%s4 + $0x50] sm:$0xff]
    %v1119 = vld [vmem:[%s4 + $0x58] sm:$0xff]
    %1121 = vrot.lane.b32.xlu0 %v1107, 64
    %v1122 = vpop.permute.xlu0 %1121
    %v1123 = vsel %vm341, %v1122, 0
    %1125 = vmatpush.msra.mxu0 0.0
    %1126 = vmatpush.msra.mxu0 0.0
    %1127 = vmatpush.msra.mxu0 0.0
    %1128 = vmatpush.msra.mxu0 0.0
    %1129 = vmatpush.msra.mxu0 0.0
    %1130 = vmatpush.msra.mxu0 0.0
    %1131 = vmatpush.msra.mxu0 0.0
    %1132 = vmatpush.msra.mxu0 0.0
    %1133 = vmatpush.msra.mxu0 %v1119
    %1134 = vmatpush.msra.mxu0 %v1118
    %1135 = vmatpush.msra.mxu0 %v1117
    %1136 = vmatpush.msra.mxu0 %v1116
    %1137 = vmatpush.msra.mxu0 %v1115
    %1138 = vmatpush.msra.mxu0 %v1114
    %1139 = vmatpush.msra.mxu0 %v1113
    %1140 = vmatpush.msra.mxu0 %v1112
    %1141 = vmatmul.f32.gmra.mxu0 %v1123
    %v1142 = vpop.f32.mrf.mxu0
    %v1143 = vadd.f32 0.0, %v1142
    %1144 = vdwg.mxu0
    %vm1145 = vcmask 261120
    %v1147 = vsel %vm1145, %v324, 0
    %1149 = vmatpush.msra.mxu0 0.0
    %1150 = vmatpush.msra.mxu0 0.0
    %1151 = vmatpush.msra.mxu0 0.0
    %1152 = vmatpush.msra.mxu0 0.0
    %1153 = vmatpush.msra.mxu0 0.0
    %1154 = vmatpush.msra.mxu0 0.0
    %1155 = vmatpush.msra.mxu0 0.0
    %1156 = vmatpush.msra.mxu0 0.0
    %1157 = vmatpush.msra.mxu0 0.0
    %1158 = vmatpush.msra.mxu0 0.0
    %1159 = vmatpush.msra.mxu0 0.0
    %1160 = vmatpush.msra.mxu0 0.0
    %1161 = vmatpush.msra.mxu0 %v1111
    %1162 = vmatpush.msra.mxu0 %v1110
    %1163 = vmatpush.msra.mxu0 %v1109
    %1164 = vmatpush.msra.mxu0 %v1108
    %1165 = vmatmul.f32.gmra.mxu0 %v1147
    %v1166 = vpop.f32.mrf.mxu0
    %v1167 = vadd.f32 %v1143, %v1166
    %1168 = vdwg.mxu0
    %v1169 = vld [vmem:[%s5] sm:$0x1]
    %v1171 = vperm.slane %v1169, 0
    %v1173 = vadd.f32 %v1167, %v1171
    %vm1174 = vcmask 25600
    %1175 = vst.msk [vmem:[#allocation5] sm:$0x3] %vm1174, %v1173
    // Predicated region
    $region30: #{tpu_custom_call.1} parent=1 // pred_check
      _
    $region31: #{tpu_custom_call.1} parent=1 // pred_check_branch
      %1177 = sbr.rel (0) target = $region33
    $region32: #{tpu_custom_call.1} parent=1 // pred_region
      %1179 = vsyncadd [#allocation4], 0
      %s1181 = sshll.u32 [#allocation5], 4
      %s1182 = int_to_ptr.vmem [resolvable:$true] %s1181
      %s1183 = sshll.u32 %s6, 4
      %s1184 = int_to_ptr.hbm [resolvable:$true] %s1183
      %1186 = dma.vmem_to_hbm [thread:$0]  %s1182, 32, %s1184, [#allocation4]
    $region33: #{tpu_custom_call.1} parent=1 // pred_fallthru
      _
    // Predicated region
    $region34: #{tpu_custom_call.1} parent=1 // pred_check
      _
    $region35: #{tpu_custom_call.1} parent=1 // pred_check_branch
      %1188 = sbr.rel (0) target = $region37
    $region36: #{tpu_custom_call.1} parent=1 // pred_region
      %1190 = dma.done [#allocation4], 32
    $region37: #{tpu_custom_call.1} parent=1 // pred_fallthru
      _
    %1191 = vsyncpa [#allocation3], 1
    %1192 = vsyncpa [#allocation4], 1

</llo_original>
